<compile_context>
chip_gen: v7x
topology: tpu7x:2x2x1
jax: 0.10.0
libtpu: 0.0.40
codegen_flags: <defaults>
</compile_context>

<pallas_src>
import jax
import jax.numpy as jnp
from jax.experimental import pallas as pl
from jax.experimental.pallas import tpu as pltpu

N_STATES = 4
N_ACTIONS = 4
MID = 8

LANES = 128          # lane width everything is padded to inside the kernel
TB = 128             # batch rows per grid step (multiple of 8 sublanes)
P_ROWS = 32          # 4 + 8 + 8 + 8 weight rows + 4 bias rows

# Row offsets inside the packed (P_ROWS, LANES) parameter slab.
W1_ROW, W2_ROW, W3_ROW, W4_ROW = 0, 4, 12, 20
B1_ROW, B2_ROW, B3_ROW, B4_ROW = 28, 29, 30, 31


def mlp_kernel(x_ref, p_ref, o_ref):
    """x_ref: (TB, N_STATES); p_ref: (P_ROWS, LANES) packed params;
    o_ref: (TB, LANES) lane-dense output (only the first N_ACTIONS lanes are real)."""
    x = x_ref[...]          # (TB, N_STATES)
    p = p_ref[...]          # (P_ROWS, LANES) -- 16 KiB, lives in vregs

    def dense(h, n_in, wrow, brow, relu):
        # Only the first n_in lanes of h carry data (the rest are exact zeros
        # because padded weight columns / bias lanes are zero).
        # Rank-1 VPU updates: acc += h[:, k] (outer) W[k, :]; static unroll.
        acc = jnp.broadcast_to(p[brow:brow + 1, :], (TB, LANES))   # bias row
        for k in range(n_in):
            acc = acc + h[:, k:k + 1] * p[wrow + k:wrow + k + 1, :]
        return jnp.maximum(acc, 0.0) if relu else acc

    h = dense(x, N_STATES, W1_ROW, B1_ROW, True)        # fc1 + relu
    h = dense(h, MID, W2_ROW, B2_ROW, True)             # fc2 + relu
    h = dense(h, MID, W3_ROW, B3_ROW, True)             # fc3 + relu
    o_ref[...] = dense(h, MID, W4_ROW, B4_ROW, False)   # out (no relu), lane-dense store


def net_forward(x, packed_params):
    """x: (B, N_STATES) float32; packed_params: (P_ROWS, LANES) float32.
    Returns (B, N_ACTIONS) float32 == x @ W1 + b1 -> relu -> ... -> @ W4 + b4."""
    B = x.shape[0]
    B_pad = ((B + TB - 1) // TB) * TB
    if B_pad != B:
        x = jnp.pad(x, ((0, B_pad - B), (0, 0)))
    n_tiles = B_pad // TB

    out_padded = pl.pallas_call(
        mlp_kernel,
        out_shape=jax.ShapeDtypeStruct((B_pad, LANES), jnp.float32),
        grid=(n_tiles,),
        in_specs=[
            pl.BlockSpec((TB, N_STATES), lambda i: (i, 0)),      # batch tile
            pl.BlockSpec((P_ROWS, LANES), lambda i: (0, 0)),     # params, resident
        ],
        out_specs=pl.BlockSpec((TB, LANES), lambda i: (i, 0)),
        compiler_params=pltpu.CompilerParams(
            dimension_semantics=("parallel",)),                  # both TCs on v7x
    )(x, packed_params)
    return out_padded[:B, :N_ACTIONS]


def init_params(key):
    """Mirror the PyTorch module: weights ~ Normal(0, 0.1); biases keep the
    nn.Linear default Uniform(-1/sqrt(fan_in), 1/sqrt(fan_in)).
    Weights stored as (in_features, out_features) so forward is x @ W + b."""
    dims = [(N_STATES, MID), (MID, MID), (MID, MID), (MID, N_ACTIONS)]
    params = []
    for (fan_in, fan_out) in dims:
        key, kw, kb = jax.random.split(key, 3)
        w = 0.1 * jax.random.normal(kw, (fan_in, fan_out), dtype=jnp.float32)
        bound = 1.0 / jnp.sqrt(float(fan_in))
        b = jax.random.uniform(kb, (1, fan_out), dtype=jnp.float32,
                               minval=-bound, maxval=bound)
        params.extend([w, b])
    return tuple(params)


def pack_params(params):
    """Pack W1..W4 (lane-padded with zeros) + b1..b4 into one (P_ROWS, LANES) slab."""
    w1, b1, w2, b2, w3, b3, w4, b4 = params

    def pad_lanes(a):
        return jnp.pad(a, ((0, 0), (0, LANES - a.shape[-1])))

    packed = jnp.concatenate(
        [pad_lanes(w1), pad_lanes(w2), pad_lanes(w3), pad_lanes(w4),
         pad_lanes(b1), pad_lanes(b2), pad_lanes(b3), pad_lanes(b4)], axis=0)
    assert packed.shape == (P_ROWS, LANES)
    return packed


def reference_forward(x, params):
    w1, b1, w2, b2, w3, b3, w4, b4 = params
    h = jnp.maximum(x @ w1 + b1, 0.0)
    h = jnp.maximum(h @ w2 + b2, 0.0)
    h = jnp.maximum(h @ w3 + b3, 0.0)
    return h @ w4 + b4


if __name__ == "__main__":
    key = jax.random.PRNGKey(0)
    key, kx = jax.random.split(key)
    batch = 256          # >= 128 to amortize per-call overhead; 2 grid tiles
    x = jax.random.normal(kx, (batch, N_STATES), dtype=jnp.float32)
    params = init_params(key)
    packed = pack_params(params)   # packed once, reused across calls (1 DMA/call)

    out = net_forward(x, packed)
    out = jax.block_until_ready(out)

    ref = reference_forward(x, params)
    assert out.shape == (batch, N_ACTIONS)
    assert jnp.allclose(out, ref, atol=1e-5, rtol=1e-5)
    print("KERNEL_OK")
</pallas_src>

<mosaic_0001>
module attributes {stable_mosaic.version = 11 : i64} {
  func.func @mlp_kernel(%arg0: i32, %arg1: memref<128x4xf32, #tpu.memory_space<vmem>>, %arg2: memref<32x128xf32, #tpu.memory_space<vmem>>, %arg3: memref<128x128xf32, #tpu.memory_space<vmem>>) attributes {dimension_semantics = [#tpu.dimension_semantics<parallel>], iteration_bounds = array<i64: 2>, scalar_prefetch = 0 : i64, scratch_operands = 0 : i64, tpu.core_type = #tpu.core_type<tc>, window_params = [{transform_indices = @transform_0, window_bounds = array<i64: 128, 4>}, {pipeline_mode = #tpu.pipeline_mode<synchronous>, transform_indices = @transform_1, window_bounds = array<i64: 32, 128>}, {transform_indices = @transform_2, window_bounds = array<i64: 128, 128>}]} {
    %c0 = arith.constant 0 : index
    %c0_0 = arith.constant 0 : index
    %0 = vector.load %arg1[%c0, %c0_0] : memref<128x4xf32, #tpu.memory_space<vmem>>, vector<128x4xf32>
    %c0_1 = arith.constant 0 : index
    %c0_2 = arith.constant 0 : index
    %1 = vector.load %arg2[%c0_1, %c0_2] : memref<32x128xf32, #tpu.memory_space<vmem>>, vector<32x128xf32>
    %2 = vector.extract_strided_slice %1 {offsets = [28, 0], sizes = [1, 128], strides = [1, 1]} : vector<32x128xf32> to vector<1x128xf32>
    %3 = vector.shape_cast %2 : vector<1x128xf32> to vector<1x128xf32>
    %4 = vector.broadcast %3 : vector<1x128xf32> to vector<128x128xf32>
    %5 = vector.extract_strided_slice %0 {offsets = [0, 0], sizes = [128, 1], strides = [1, 1]} : vector<128x4xf32> to vector<128x1xf32>
    %6 = vector.extract_strided_slice %1 {offsets = [0, 0], sizes = [1, 128], strides = [1, 1]} : vector<32x128xf32> to vector<1x128xf32>
    %7 = vector.broadcast %5 : vector<128x1xf32> to vector<128x128xf32>
    %8 = vector.broadcast %6 : vector<1x128xf32> to vector<128x128xf32>
    %9 = arith.mulf %7, %8 : vector<128x128xf32>
    %10 = arith.addf %4, %9 : vector<128x128xf32>
    %11 = vector.extract_strided_slice %0 {offsets = [0, 1], sizes = [128, 1], strides = [1, 1]} : vector<128x4xf32> to vector<128x1xf32>
    %12 = vector.extract_strided_slice %1 {offsets = [1, 0], sizes = [1, 128], strides = [1, 1]} : vector<32x128xf32> to vector<1x128xf32>
    %13 = vector.broadcast %11 : vector<128x1xf32> to vector<128x128xf32>
    %14 = vector.broadcast %12 : vector<1x128xf32> to vector<128x128xf32>
    %15 = arith.mulf %13, %14 : vector<128x128xf32>
    %16 = arith.addf %10, %15 : vector<128x128xf32>
    %17 = vector.extract_strided_slice %0 {offsets = [0, 2], sizes = [128, 1], strides = [1, 1]} : vector<128x4xf32> to vector<128x1xf32>
    %18 = vector.extract_strided_slice %1 {offsets = [2, 0], sizes = [1, 128], strides = [1, 1]} : vector<32x128xf32> to vector<1x128xf32>
    %19 = vector.broadcast %17 : vector<128x1xf32> to vector<128x128xf32>
    %20 = vector.broadcast %18 : vector<1x128xf32> to vector<128x128xf32>
    %21 = arith.mulf %19, %20 : vector<128x128xf32>
    %22 = arith.addf %16, %21 : vector<128x128xf32>
    %23 = vector.extract_strided_slice %0 {offsets = [0, 3], sizes = [128, 1], strides = [1, 1]} : vector<128x4xf32> to vector<128x1xf32>
    %24 = vector.extract_strided_slice %1 {offsets = [3, 0], sizes = [1, 128], strides = [1, 1]} : vector<32x128xf32> to vector<1x128xf32>
    %25 = vector.broadcast %23 : vector<128x1xf32> to vector<128x128xf32>
    %26 = vector.broadcast %24 : vector<1x128xf32> to vector<128x128xf32>
    %27 = arith.mulf %25, %26 : vector<128x128xf32>
    %28 = arith.addf %22, %27 : vector<128x128xf32>
    %cst = arith.constant 0.000000e+00 : f32
    %29 = vector.broadcast %cst : f32 to vector<128x128xf32>
    %30 = arith.maximumf %28, %29 : vector<128x128xf32>
    %31 = vector.extract_strided_slice %1 {offsets = [29, 0], sizes = [1, 128], strides = [1, 1]} : vector<32x128xf32> to vector<1x128xf32>
    %32 = vector.shape_cast %31 : vector<1x128xf32> to vector<1x128xf32>
    %33 = vector.broadcast %32 : vector<1x128xf32> to vector<128x128xf32>
    %34 = vector.extract_strided_slice %30 {offsets = [0, 0], sizes = [128, 1], strides = [1, 1]} : vector<128x128xf32> to vector<128x1xf32>
    %35 = vector.extract_strided_slice %1 {offsets = [4, 0], sizes = [1, 128], strides = [1, 1]} : vector<32x128xf32> to vector<1x128xf32>
    %36 = vector.broadcast %34 : vector<128x1xf32> to vector<128x128xf32>
    %37 = vector.broadcast %35 : vector<1x128xf32> to vector<128x128xf32>
    %38 = arith.mulf %36, %37 : vector<128x128xf32>
    %39 = arith.addf %33, %38 : vector<128x128xf32>
    %40 = vector.extract_strided_slice %30 {offsets = [0, 1], sizes = [128, 1], strides = [1, 1]} : vector<128x128xf32> to vector<128x1xf32>
    %41 = vector.extract_strided_slice %1 {offsets = [5, 0], sizes = [1, 128], strides = [1, 1]} : vector<32x128xf32> to vector<1x128xf32>
    %42 = vector.broadcast %40 : vector<128x1xf32> to vector<128x128xf32>
    %43 = vector.broadcast %41 : vector<1x128xf32> to vector<128x128xf32>
    %44 = arith.mulf %42, %43 : vector<128x128xf32>
    %45 = arith.addf %39, %44 : vector<128x128xf32>
    %46 = vector.extract_strided_slice %30 {offsets = [0, 2], sizes = [128, 1], strides = [1, 1]} : vector<128x128xf32> to vector<128x1xf32>
    %47 = vector.extract_strided_slice %1 {offsets = [6, 0], sizes = [1, 128], strides = [1, 1]} : vector<32x128xf32> to vector<1x128xf32>
    %48 = vector.broadcast %46 : vector<128x1xf32> to vector<128x128xf32>
    %49 = vector.broadcast %47 : vector<1x128xf32> to vector<128x128xf32>
    %50 = arith.mulf %48, %49 : vector<128x128xf32>
    %51 = arith.addf %45, %50 : vector<128x128xf32>
    %52 = vector.extract_strided_slice %30 {offsets = [0, 3], sizes = [128, 1], strides = [1, 1]} : vector<128x128xf32> to vector<128x1xf32>
    %53 = vector.extract_strided_slice %1 {offsets = [7, 0], sizes = [1, 128], strides = [1, 1]} : vector<32x128xf32> to vector<1x128xf32>
    %54 = vector.broadcast %52 : vector<128x1xf32> to vector<128x128xf32>
    %55 = vector.broadcast %53 : vector<1x128xf32> to vector<128x128xf32>
    %56 = arith.mulf %54, %55 : vector<128x128xf32>
    %57 = arith.addf %51, %56 : vector<128x128xf32>
    %58 = vector.extract_strided_slice %30 {offsets = [0, 4], sizes = [128, 1], strides = [1, 1]} : vector<128x128xf32> to vector<128x1xf32>
    %59 = vector.extract_strided_slice %1 {offsets = [8, 0], sizes = [1, 128], strides = [1, 1]} : vector<32x128xf32> to vector<1x128xf32>
    %60 = vector.broadcast %58 : vector<128x1xf32> to vector<128x128xf32>
    %61 = vector.broadcast %59 : vector<1x128xf32> to vector<128x128xf32>
    %62 = arith.mulf %60, %61 : vector<128x128xf32>
    %63 = arith.addf %57, %62 : vector<128x128xf32>
    %64 = vector.extract_strided_slice %30 {offsets = [0, 5], sizes = [128, 1], strides = [1, 1]} : vector<128x128xf32> to vector<128x1xf32>
    %65 = vector.extract_strided_slice %1 {offsets = [9, 0], sizes = [1, 128], strides = [1, 1]} : vector<32x128xf32> to vector<1x128xf32>
    %66 = vector.broadcast %64 : vector<128x1xf32> to vector<128x128xf32>
    %67 = vector.broadcast %65 : vector<1x128xf32> to vector<128x128xf32>
    %68 = arith.mulf %66, %67 : vector<128x128xf32>
    %69 = arith.addf %63, %68 : vector<128x128xf32>
    %70 = vector.extract_strided_slice %30 {offsets = [0, 6], sizes = [128, 1], strides = [1, 1]} : vector<128x128xf32> to vector<128x1xf32>
    %71 = vector.extract_strided_slice %1 {offsets = [10, 0], sizes = [1, 128], strides = [1, 1]} : vector<32x128xf32> to vector<1x128xf32>
    %72 = vector.broadcast %70 : vector<128x1xf32> to vector<128x128xf32>
    %73 = vector.broadcast %71 : vector<1x128xf32> to vector<128x128xf32>
    %74 = arith.mulf %72, %73 : vector<128x128xf32>
    %75 = arith.addf %69, %74 : vector<128x128xf32>
    %76 = vector.extract_strided_slice %30 {offsets = [0, 7], sizes = [128, 1], strides = [1, 1]} : vector<128x128xf32> to vector<128x1xf32>
    %77 = vector.extract_strided_slice %1 {offsets = [11, 0], sizes = [1, 128], strides = [1, 1]} : vector<32x128xf32> to vector<1x128xf32>
    %78 = vector.broadcast %76 : vector<128x1xf32> to vector<128x128xf32>
    %79 = vector.broadcast %77 : vector<1x128xf32> to vector<128x128xf32>
    %80 = arith.mulf %78, %79 : vector<128x128xf32>
    %81 = arith.addf %75, %80 : vector<128x128xf32>
    %cst_3 = arith.constant 0.000000e+00 : f32
    %82 = vector.broadcast %cst_3 : f32 to vector<128x128xf32>
    %83 = arith.maximumf %81, %82 : vector<128x128xf32>
    %84 = vector.extract_strided_slice %1 {offsets = [30, 0], sizes = [1, 128], strides = [1, 1]} : vector<32x128xf32> to vector<1x128xf32>
    %85 = vector.shape_cast %84 : vector<1x128xf32> to vector<1x128xf32>
    %86 = vector.broadcast %85 : vector<1x128xf32> to vector<128x128xf32>
    %87 = vector.extract_strided_slice %83 {offsets = [0, 0], sizes = [128, 1], strides = [1, 1]} : vector<128x128xf32> to vector<128x1xf32>
    %88 = vector.extract_strided_slice %1 {offsets = [12, 0], sizes = [1, 128], strides = [1, 1]} : vector<32x128xf32> to vector<1x128xf32>
    %89 = vector.broadcast %87 : vector<128x1xf32> to vector<128x128xf32>
    %90 = vector.broadcast %88 : vector<1x128xf32> to vector<128x128xf32>
    %91 = arith.mulf %89, %90 : vector<128x128xf32>
    %92 = arith.addf %86, %91 : vector<128x128xf32>
    %93 = vector.extract_strided_slice %83 {offsets = [0, 1], sizes = [128, 1], strides = [1, 1]} : vector<128x128xf32> to vector<128x1xf32>
    %94 = vector.extract_strided_slice %1 {offsets = [13, 0], sizes = [1, 128], strides = [1, 1]} : vector<32x128xf32> to vector<1x128xf32>
    %95 = vector.broadcast %93 : vector<128x1xf32> to vector<128x128xf32>
    %96 = vector.broadcast %94 : vector<1x128xf32> to vector<128x128xf32>
    %97 = arith.mulf %95, %96 : vector<128x128xf32>
    %98 = arith.addf %92, %97 : vector<128x128xf32>
    %99 = vector.extract_strided_slice %83 {offsets = [0, 2], sizes = [128, 1], strides = [1, 1]} : vector<128x128xf32> to vector<128x1xf32>
    %100 = vector.extract_strided_slice %1 {offsets = [14, 0], sizes = [1, 128], strides = [1, 1]} : vector<32x128xf32> to vector<1x128xf32>
    %101 = vector.broadcast %99 : vector<128x1xf32> to vector<128x128xf32>
    %102 = vector.broadcast %100 : vector<1x128xf32> to vector<128x128xf32>
    %103 = arith.mulf %101, %102 : vector<128x128xf32>
    %104 = arith.addf %98, %103 : vector<128x128xf32>
    %105 = vector.extract_strided_slice %83 {offsets = [0, 3], sizes = [128, 1], strides = [1, 1]} : vector<128x128xf32> to vector<128x1xf32>
    %106 = vector.extract_strided_slice %1 {offsets = [15, 0], sizes = [1, 128], strides = [1, 1]} : vector<32x128xf32> to vector<1x128xf32>
    %107 = vector.broadcast %105 : vector<128x1xf32> to vector<128x128xf32>
    %108 = vector.broadcast %106 : vector<1x128xf32> to vector<128x128xf32>
    %109 = arith.mulf %107, %108 : vector<128x128xf32>
    %110 = arith.addf %104, %109 : vector<128x128xf32>
    %111 = vector.extract_strided_slice %83 {offsets = [0, 4], sizes = [128, 1], strides = [1, 1]} : vector<128x128xf32> to vector<128x1xf32>
    %112 = vector.extract_strided_slice %1 {offsets = [16, 0], sizes = [1, 128], strides = [1, 1]} : vector<32x128xf32> to vector<1x128xf32>
    %113 = vector.broadcast %111 : vector<128x1xf32> to vector<128x128xf32>
    %114 = vector.broadcast %112 : vector<1x128xf32> to vector<128x128xf32>
    %115 = arith.mulf %113, %114 : vector<128x128xf32>
    %116 = arith.addf %110, %115 : vector<128x128xf32>
    %117 = vector.extract_strided_slice %83 {offsets = [0, 5], sizes = [128, 1], strides = [1, 1]} : vector<128x128xf32> to vector<128x1xf32>
    %118 = vector.extract_strided_slice %1 {offsets = [17, 0], sizes = [1, 128], strides = [1, 1]} : vector<32x128xf32> to vector<1x128xf32>
    %119 = vector.broadcast %117 : vector<128x1xf32> to vector<128x128xf32>
    %120 = vector.broadcast %118 : vector<1x128xf32> to vector<128x128xf32>
    %121 = arith.mulf %119, %120 : vector<128x128xf32>
    %122 = arith.addf %116, %121 : vector<128x128xf32>
    %123 = vector.extract_strided_slice %83 {offsets = [0, 6], sizes = [128, 1], strides = [1, 1]} : vector<128x128xf32> to vector<128x1xf32>
    %124 = vector.extract_strided_slice %1 {offsets = [18, 0], sizes = [1, 128], strides = [1, 1]} : vector<32x128xf32> to vector<1x128xf32>
    %125 = vector.broadcast %123 : vector<128x1xf32> to vector<128x128xf32>
    %126 = vector.broadcast %124 : vector<1x128xf32> to vector<128x128xf32>
    %127 = arith.mulf %125, %126 : vector<128x128xf32>
    %128 = arith.addf %122, %127 : vector<128x128xf32>
    %129 = vector.extract_strided_slice %83 {offsets = [0, 7], sizes = [128, 1], strides = [1, 1]} : vector<128x128xf32> to vector<128x1xf32>
    %130 = vector.extract_strided_slice %1 {offsets = [19, 0], sizes = [1, 128], strides = [1, 1]} : vector<32x128xf32> to vector<1x128xf32>
    %131 = vector.broadcast %129 : vector<128x1xf32> to vector<128x128xf32>
    %132 = vector.broadcast %130 : vector<1x128xf32> to vector<128x128xf32>
    %133 = arith.mulf %131, %132 : vector<128x128xf32>
    %134 = arith.addf %128, %133 : vector<128x128xf32>
    %cst_4 = arith.constant 0.000000e+00 : f32
    %135 = vector.broadcast %cst_4 : f32 to vector<128x128xf32>
    %136 = arith.maximumf %134, %135 : vector<128x128xf32>
    %137 = vector.extract_strided_slice %1 {offsets = [31, 0], sizes = [1, 128], strides = [1, 1]} : vector<32x128xf32> to vector<1x128xf32>
    %138 = vector.shape_cast %137 : vector<1x128xf32> to vector<1x128xf32>
    %139 = vector.broadcast %138 : vector<1x128xf32> to vector<128x128xf32>
    %140 = vector.extract_strided_slice %136 {offsets = [0, 0], sizes = [128, 1], strides = [1, 1]} : vector<128x128xf32> to vector<128x1xf32>
    %141 = vector.extract_strided_slice %1 {offsets = [20, 0], sizes = [1, 128], strides = [1, 1]} : vector<32x128xf32> to vector<1x128xf32>
    %142 = vector.broadcast %140 : vector<128x1xf32> to vector<128x128xf32>
    %143 = vector.broadcast %141 : vector<1x128xf32> to vector<128x128xf32>
    %144 = arith.mulf %142, %143 : vector<128x128xf32>
    %145 = arith.addf %139, %144 : vector<128x128xf32>
    %146 = vector.extract_strided_slice %136 {offsets = [0, 1], sizes = [128, 1], strides = [1, 1]} : vector<128x128xf32> to vector<128x1xf32>
    %147 = vector.extract_strided_slice %1 {offsets = [21, 0], sizes = [1, 128], strides = [1, 1]} : vector<32x128xf32> to vector<1x128xf32>
    %148 = vector.broadcast %146 : vector<128x1xf32> to vector<128x128xf32>
    %149 = vector.broadcast %147 : vector<1x128xf32> to vector<128x128xf32>
    %150 = arith.mulf %148, %149 : vector<128x128xf32>
    %151 = arith.addf %145, %150 : vector<128x128xf32>
    %152 = vector.extract_strided_slice %136 {offsets = [0, 2], sizes = [128, 1], strides = [1, 1]} : vector<128x128xf32> to vector<128x1xf32>
    %153 = vector.extract_strided_slice %1 {offsets = [22, 0], sizes = [1, 128], strides = [1, 1]} : vector<32x128xf32> to vector<1x128xf32>
    %154 = vector.broadcast %152 : vector<128x1xf32> to vector<128x128xf32>
    %155 = vector.broadcast %153 : vector<1x128xf32> to vector<128x128xf32>
    %156 = arith.mulf %154, %155 : vector<128x128xf32>
    %157 = arith.addf %151, %156 : vector<128x128xf32>
    %158 = vector.extract_strided_slice %136 {offsets = [0, 3], sizes = [128, 1], strides = [1, 1]} : vector<128x128xf32> to vector<128x1xf32>
    %159 = vector.extract_strided_slice %1 {offsets = [23, 0], sizes = [1, 128], strides = [1, 1]} : vector<32x128xf32> to vector<1x128xf32>
    %160 = vector.broadcast %158 : vector<128x1xf32> to vector<128x128xf32>
    %161 = vector.broadcast %159 : vector<1x128xf32> to vector<128x128xf32>
    %162 = arith.mulf %160, %161 : vector<128x128xf32>
    %163 = arith.addf %157, %162 : vector<128x128xf32>
    %164 = vector.extract_strided_slice %136 {offsets = [0, 4], sizes = [128, 1], strides = [1, 1]} : vector<128x128xf32> to vector<128x1xf32>
    %165 = vector.extract_strided_slice %1 {offsets = [24, 0], sizes = [1, 128], strides = [1, 1]} : vector<32x128xf32> to vector<1x128xf32>
    %166 = vector.broadcast %164 : vector<128x1xf32> to vector<128x128xf32>
    %167 = vector.broadcast %165 : vector<1x128xf32> to vector<128x128xf32>
    %168 = arith.mulf %166, %167 : vector<128x128xf32>
    %169 = arith.addf %163, %168 : vector<128x128xf32>
    %170 = vector.extract_strided_slice %136 {offsets = [0, 5], sizes = [128, 1], strides = [1, 1]} : vector<128x128xf32> to vector<128x1xf32>
    %171 = vector.extract_strided_slice %1 {offsets = [25, 0], sizes = [1, 128], strides = [1, 1]} : vector<32x128xf32> to vector<1x128xf32>
    %172 = vector.broadcast %170 : vector<128x1xf32> to vector<128x128xf32>
    %173 = vector.broadcast %171 : vector<1x128xf32> to vector<128x128xf32>
    %174 = arith.mulf %172, %173 : vector<128x128xf32>
    %175 = arith.addf %169, %174 : vector<128x128xf32>
    %176 = vector.extract_strided_slice %136 {offsets = [0, 6], sizes = [128, 1], strides = [1, 1]} : vector<128x128xf32> to vector<128x1xf32>
    %177 = vector.extract_strided_slice %1 {offsets = [26, 0], sizes = [1, 128], strides = [1, 1]} : vector<32x128xf32> to vector<1x128xf32>
    %178 = vector.broadcast %176 : vector<128x1xf32> to vector<128x128xf32>
    %179 = vector.broadcast %177 : vector<1x128xf32> to vector<128x128xf32>
    %180 = arith.mulf %178, %179 : vector<128x128xf32>
    %181 = arith.addf %175, %180 : vector<128x128xf32>
    %182 = vector.extract_strided_slice %136 {offsets = [0, 7], sizes = [128, 1], strides = [1, 1]} : vector<128x128xf32> to vector<128x1xf32>
    %183 = vector.extract_strided_slice %1 {offsets = [27, 0], sizes = [1, 128], strides = [1, 1]} : vector<32x128xf32> to vector<1x128xf32>
    %184 = vector.broadcast %182 : vector<128x1xf32> to vector<128x128xf32>
    %185 = vector.broadcast %183 : vector<1x128xf32> to vector<128x128xf32>
    %186 = arith.mulf %184, %185 : vector<128x128xf32>
    %187 = arith.addf %181, %186 : vector<128x128xf32>
    %c0_5 = arith.constant 0 : index
    %c0_6 = arith.constant 0 : index
    %188 = vector.load %arg3[%c0_5, %c0_6] : memref<128x128xf32, #tpu.memory_space<vmem>>, vector<128x128xf32>
    tpu.vector_store %arg3[%c0_5, %c0_6], %187 {strides = array<i32>} : memref<128x128xf32, #tpu.memory_space<vmem>>, vector<128x128xf32>,
    return
  }
  func.func @transform_0(%arg0: i32) -> (i32, i32) {
    %c0_i32 = arith.constant 0 : i32
    %c0_i32_0 = arith.constant 0 : i32
    return %arg0, %c0_i32 : i32, i32
  }
  func.func @transform_1(%arg0: i32) -> (i32, i32) {
    %c0_i32 = arith.constant 0 : i32
    %c0_i32_0 = arith.constant 0 : i32
    %c0_i32_1 = arith.constant 0 : i32
    return %c0_i32, %c0_i32_0 : i32, i32
  }
  func.func @transform_2(%arg0: i32) -> (i32, i32) {
    %c0_i32 = arith.constant 0 : i32
    %c0_i32_0 = arith.constant 0 : i32
    return %arg0, %c0_i32 : i32, i32
  }
}

</mosaic_0001>

<llo_original>
// kernel: tpu_custom_call.1
$region0: #{tpu_custom_call.1}
  #allocation0 [shape = 'u32[]', space=smem, size = 0x4, offset = 0x4, fixed_abs, tag = 'smem constant byte address 0x4 - core index']
  #allocation1 [shape = 'u32[144,128]{1,0:T(1,128)}', space=vmem, size = 0x12000, scoped, tag = 'internal scratch']
  %s0 = inlined_call_operand.vmem [shape: f32[256,4], index: 0, kind: input, shape index: {}]
  %s1 = inlined_call_operand.vmem [shape: f32[32,128], index: 1, kind: input, shape index: {}]
  %s2 = inlined_call_operand.hbm [shape: f32[256,128], index: 2, kind: output, shape index: {}]
  %s3 = sld [smem:[#allocation0]]
  $region41: #{tpu_custom_call.1} parent=0
    _
  %s5 = ssub.s32 1, %s3
  %s6 = scalar_select 0, %s5, %s3
  $region1: #{tpu_custom_call.1} parent=0
    #allocation2 [shape = 'u8[131072]{0}', space=vmem, size = 0x20000, scoped, tag = 'output window, operand 0']
    #allocation3 [shape = 's32[2]{0}', space=sflag, size = 0x8, scoped, tag = 'scoped memory for tpu_custom_call.1']
    %7 = vsyncpa [#allocation3], 0
    %s8 = scalar_lea.sflag [#allocation3], 1
    %9 = vsyncpa %s8, 0
    loop: start=0, step=1, limit=4
    $region2: #{tpu_custom_call.1} parent=1 // loop_pre_header
      _
    $region3: #{tpu_custom_call.1} parent=1 // loop_header
      %s11 = sphi 0, %s15
      %p12 = scmp.ge.s32.totalorder %s11, 4
      %s21 = sphi 0, %s23
      %s24 = sphi 0, %s21
      %s25 = sphi 0, %s24
      %s41 = sphi 0, %s25
      %s45 = sphi 0, %s45
      %s47 = sphi 0, %s45
      %s48 = sphi 0, %s47
      %s62 = sphi 0, %s48
      %s68 = sphi 0, %s70
      %s71 = sphi 0, %s68
      %s72 = sphi 0, %s71
      %s88 = sphi 0, %s72
    $region4: #{tpu_custom_call.1} parent=1 // loop_header_branch
      %14 = sbr.rel (%p12) target = $region8
    $region5: #{tpu_custom_call.1} parent=1 // loop_body
      %s16 = ssub.s32 %s11, 1
      %s17 = ssub.s32 %s11, 2
      %s18 = sadd.s32 %s11, 1
      %s19 = ssub.s32 %s11, %s18
      %p20 = scmp.eq.s32.totalorder %s19, 0
      %s22 = sadd.s32 %s21, 1
      %s23 = scalar_select %p20, %s21, %s22
      %p26 = pneg %p20
      %p27 = scmp.eq.s32.totalorder %s11, 1
      %p28 = por %p26, %p27
      %p29 = scmp.ne.s32.totalorder %s21, %s24
      %p30 = scmp.eq.s32.totalorder %s11, 0
      %p31 = por %p29, %p30
      %p32 = scmp.ne.s32.totalorder %s21, %s24
      %p33 = scmp.eq.s32.totalorder %s16, 1
      %p34 = por %p32, %p33
      %p35 = scmp.ne.s32.totalorder %s24, %s25
      %p36 = scmp.eq.s32.totalorder %s16, 0
      %p37 = por %p35, %p36
      %p38 = scmp.ne.s32.totalorder %s24, %s25
      %p39 = scmp.eq.s32.totalorder %s17, 1
      %p40 = por %p38, %p39
      %p42 = scmp.ne.s32.totalorder %s25, %s41
      %p43 = scmp.eq.s32.totalorder %s17, 0
      %p44 = por %p42, %p43
      %s46 = sadd.s32 %s45, 1
      %p49 = scmp.eq.s32.totalorder %s11, 1
      %p50 = scmp.ne.s32.totalorder %s45, %s47
      %p51 = scmp.eq.s32.totalorder %s11, 0
      %p52 = por %p50, %p51
      %p53 = scmp.ne.s32.totalorder %s45, %s47
      %p54 = scmp.eq.s32.totalorder %s16, 1
      %p55 = por %p53, %p54
      %p56 = scmp.ne.s32.totalorder %s47, %s48
      %p57 = scmp.eq.s32.totalorder %s16, 0
      %p58 = por %p56, %p57
      %p59 = scmp.ne.s32.totalorder %s47, %s48
      %p60 = scmp.eq.s32.totalorder %s17, 1
      %p61 = por %p59, %p60
      %p63 = scmp.ne.s32.totalorder %s48, %s62
      %p64 = scmp.eq.s32.totalorder %s17, 0
      %p65 = por %p63, %p64
      %s66 = ssub.s32 %s11, %s18
      %p67 = scmp.eq.s32.totalorder %s66, 0
      %s69 = sadd.s32 %s68, 1
      %s70 = scalar_select %p67, %s68, %s69
      %p73 = pneg %p67
      %p74 = scmp.eq.s32.totalorder %s11, 1
      %p75 = por %p73, %p74
      %p76 = scmp.ne.s32.totalorder %s68, %s71
      %p77 = scmp.eq.s32.totalorder %s11, 0
      %p78 = por %p76, %p77
      %p79 = scmp.ne.s32.totalorder %s68, %s71
      %p80 = scmp.eq.s32.totalorder %s16, 1
      %p81 = por %p79, %p80
      %p82 = scmp.ne.s32.totalorder %s71, %s72
      %p83 = scmp.eq.s32.totalorder %s16, 0
      %p84 = por %p82, %p83
      %p85 = scmp.ne.s32.totalorder %s71, %s72
      %p86 = scmp.eq.s32.totalorder %s17, 1
      %p87 = por %p85, %p86
      %p89 = scmp.ne.s32.totalorder %s72, %s88
      %p90 = scmp.eq.s32.totalorder %s17, 0
      %p91 = por %p89, %p90
      %p92 = scmp.le.s32.totalorder 1, %s11
      %p93 = scmp.lt.s32.totalorder %s11, 3
      %p94 = pnand %p92, %p93
      %p95 = pneg %p94
      // Predicated region
      $region9: #{tpu_custom_call.1} parent=5 // pred_check
        _
      $region10: #{tpu_custom_call.1} parent=5 // pred_check_branch
        %97 = sbr.rel (%p94) target = $region12
      $region11: #{tpu_custom_call.1} parent=5 // pred_region
        %s98 = ssub.s32 %s11, 1
        // Predicated region
        $region13: #{tpu_custom_call.1} parent=11 // pred_check
          %p99 = pneg %p58
        $region14: #{tpu_custom_call.1} parent=11 // pred_check_branch
          %101 = sbr.rel (%p99) target = $region16
        $region15: #{tpu_custom_call.1} parent=11 // pred_region
          _
        $region16: #{tpu_custom_call.1} parent=11 // pred_fallthru
          _
      $region12: #{tpu_custom_call.1} parent=5 // pred_fallthru
        _
      %p102 = scmp.lt.s32.totalorder %s11, 2
      // Predicated region
      $region17: #{tpu_custom_call.1} parent=5 // pred_check
        %p103 = pneg %p102
      $region18: #{tpu_custom_call.1} parent=5 // pred_check_branch
        %105 = sbr.rel (%p103) target = $region20
      $region19: #{tpu_custom_call.1} parent=5 // pred_region
        // Predicated region
        $region21: #{tpu_custom_call.1} parent=19 // pred_check
          %p106 = pneg %p31
        $region22: #{tpu_custom_call.1} parent=19 // pred_check_branch
          %108 = sbr.rel (%p106) target = $region24
        $region23: #{tpu_custom_call.1} parent=19 // pred_region
          %s109 = smul.u32 16, %s11
          %p110 = scmp.lt.s32.totalorder %s109, 31
          %s111 = scalar_select %p110, %s109, 31
          %s112 = smul.addr %s111, 8
          %s113 = scalar_lea.vmem %s0, %s112
          %s114 = smul.u32 16, %s11
        $region24: #{tpu_custom_call.1} parent=19 // pred_fallthru
          _
      $region20: #{tpu_custom_call.1} parent=5 // pred_fallthru
        _
      %p115 = scmp.le.s32.totalorder 1, %s11
      %p116 = scmp.lt.s32.totalorder %s11, 3
      %p117 = pnand %p115, %p116
      %p118 = pneg %p117
      // Predicated region
      $region25: #{tpu_custom_call.1} parent=5 // pred_check
        _
      $region26: #{tpu_custom_call.1} parent=5 // pred_check_branch
        %120 = sbr.rel (%p117) target = $region28
      $region27: #{tpu_custom_call.1} parent=5 // pred_region
        %s121 = ssub.s32 %s11, 1
        %s122 = smul.u32 16, %s16
        %p123 = scmp.lt.s32.totalorder %s122, 31
        %s124 = scalar_select %p123, %s122, 31
        %s125 = smul.addr %s124, 8
        %s126 = scalar_lea.vmem %s0, %s125
        %p127 = pneg %p37
        %p128 = pneg %p34
        %p129 = pneg %p58
        %p130 = pneg %p55
        %p131 = pneg %p84
        %p132 = pneg %p81
        %s133 = sand.u32 %s71, 1
        %s134 = scalar_lea.sflag [#allocation3], %s133
        %s135 = sand.u32 %s71, 1
        %s136 = smul.addr %s135, 128
        %s137 = scalar_lea.vmem [#allocation2], %s136
        %s138 = smul.u32 16, %s16
        %p139 = scmp.lt.s32.totalorder %s138, 31
        %s140 = scalar_select %p139, %s138, 31
        %s141 = smul.addr %s140, 8
        %s142 = scalar_lea.vmem %s0, %s141
        %s143 = smul.u32 16, %s16
        %s144 = smul.u32 16, %s16
        %v145 = vld [vmem:[%s142] sm:$0xff]
        %v146 = vld [vmem:[%s142 + $0x8] sm:$0xff]
        %v147 = vld [vmem:[%s142 + $0x10] sm:$0xff]
        %v148 = vld [vmem:[%s142 + $0x18] sm:$0xff]
        %v149 = vld [vmem:[%s142 + $0x20] sm:$0xff]
        %v150 = vld [vmem:[%s142 + $0x28] sm:$0xff]
        %v151 = vld [vmem:[%s142 + $0x30] sm:$0xff]
        %v152 = vld [vmem:[%s142 + $0x38] sm:$0xff]
        %v153 = vld [vmem:[%s142 + $0x40] sm:$0xff]
        %v154 = vld [vmem:[%s142 + $0x48] sm:$0xff]
        %v155 = vld [vmem:[%s142 + $0x50] sm:$0xff]
        %v156 = vld [vmem:[%s142 + $0x58] sm:$0xff]
        %v157 = vld [vmem:[%s142 + $0x60] sm:$0xff]
        %v158 = vld [vmem:[%s142 + $0x68] sm:$0xff]
        %v159 = vld [vmem:[%s142 + $0x70] sm:$0xff]
        %v160 = vld [vmem:[%s142 + $0x78] sm:$0xff]
        %v161 = vld [vmem:[%s1] sm:$0xff]
        %v162 = vld [vmem:[%s1 + $0x8] sm:$0xff]
        %v163 = vld [vmem:[%s1 + $0x10] sm:$0xff]
        %v164 = vld [vmem:[%s1 + $0x18] sm:$0xff]
        %v165 = vlaneseq
        %v166 = vshrl.u32 %v165, 7
        %v167 = vsub.s32 4, %v166
        %v168 = vrot.slane %v164, %v167
        %170 = vset.pattern.permute.xlu0 0
        %171 = vperm.xlu0 %170, %v145
        %v172 = vpop.permute.xlu0 %171
        %175 = vset.pattern.permute.xlu0 0
        %176 = vperm.xlu0 %175, %v146
        %v177 = vpop.permute.xlu0 %176
        %180 = vset.pattern.permute.xlu0 0
        %181 = vperm.xlu0 %180, %v147
        %v182 = vpop.permute.xlu0 %181
        %185 = vset.pattern.permute.xlu0 0
        %186 = vperm.xlu0 %185, %v148
        %v187 = vpop.permute.xlu0 %186
        %190 = vset.pattern.permute.xlu0 0
        %191 = vperm.xlu0 %190, %v149
        %v192 = vpop.permute.xlu0 %191
        %195 = vset.pattern.permute.xlu0 0
        %196 = vperm.xlu0 %195, %v150
        %v197 = vpop.permute.xlu0 %196
        %200 = vset.pattern.permute.xlu0 0
        %201 = vperm.xlu0 %200, %v151
        %v202 = vpop.permute.xlu0 %201
        %205 = vset.pattern.permute.xlu0 0
        %206 = vperm.xlu0 %205, %v152
        %v207 = vpop.permute.xlu0 %206
        %210 = vset.pattern.permute.xlu0 0
        %211 = vperm.xlu0 %210, %v153
        %v212 = vpop.permute.xlu0 %211
        %215 = vset.pattern.permute.xlu0 0
        %216 = vperm.xlu0 %215, %v154
        %v217 = vpop.permute.xlu0 %216
        %220 = vset.pattern.permute.xlu0 0
        %221 = vperm.xlu0 %220, %v155
        %v222 = vpop.permute.xlu0 %221
        %225 = vset.pattern.permute.xlu0 0
        %226 = vperm.xlu0 %225, %v156
        %v227 = vpop.permute.xlu0 %226
        %230 = vset.pattern.permute.xlu0 0
        %231 = vperm.xlu0 %230, %v157
        %v232 = vpop.permute.xlu0 %231
        %235 = vset.pattern.permute.xlu0 0
        %236 = vperm.xlu0 %235, %v158
        %v237 = vpop.permute.xlu0 %236
        %240 = vset.pattern.permute.xlu0 0
        %241 = vperm.xlu0 %240, %v159
        %v242 = vpop.permute.xlu0 %241
        %245 = vset.pattern.permute.xlu0 0
        %246 = vperm.xlu0 %245, %v160
        %v247 = vpop.permute.xlu0 %246
        %v249 = vlaneseq
        %v250 = vshrl.u32 %v249, 7
        %v251 = vsub.s32 0, %v250
        %v252 = vrot.slane %v161, %v251
        %v253 = vmul.f32 %v172, %v252
        %v254 = vmul.f32 %v177, %v252
        %v255 = vmul.f32 %v182, %v252
        %v256 = vmul.f32 %v187, %v252
        %v257 = vmul.f32 %v192, %v252
        %v258 = vmul.f32 %v197, %v252
        %v259 = vmul.f32 %v202, %v252
        %v260 = vmul.f32 %v207, %v252
        %v261 = vmul.f32 %v212, %v252
        %v262 = vmul.f32 %v217, %v252
        %v263 = vmul.f32 %v222, %v252
        %v264 = vmul.f32 %v227, %v252
        %v265 = vmul.f32 %v232, %v252
        %v266 = vmul.f32 %v237, %v252
        %v267 = vmul.f32 %v242, %v252
        %v268 = vmul.f32 %v247, %v252
        %v269 = vadd.f32 %v168, %v253
        %v270 = vadd.f32 %v168, %v254
        %v271 = vadd.f32 %v168, %v255
        %v272 = vadd.f32 %v168, %v256
        %v273 = vadd.f32 %v168, %v257
        %v274 = vadd.f32 %v168, %v258
        %v275 = vadd.f32 %v168, %v259
        %v276 = vadd.f32 %v168, %v260
        %v277 = vadd.f32 %v168, %v261
        %v278 = vadd.f32 %v168, %v262
        %v279 = vadd.f32 %v168, %v263
        %v280 = vadd.f32 %v168, %v264
        %v281 = vadd.f32 %v168, %v265
        %v282 = vadd.f32 %v168, %v266
        %v283 = vadd.f32 %v168, %v267
        %v284 = vadd.f32 %v168, %v268
        %285 = vset.pattern.permute.xlu0 1
        %286 = vperm.xlu0 %285, %v145
        %v287 = vpop.permute.xlu0 %286
        %289 = vset.pattern.permute.xlu0 1
        %290 = vperm.xlu0 %289, %v146
        %v291 = vpop.permute.xlu0 %290
        %293 = vset.pattern.permute.xlu0 1
        %294 = vperm.xlu0 %293, %v147
        %v295 = vpop.permute.xlu0 %294
        %297 = vset.pattern.permute.xlu0 1
        %298 = vperm.xlu0 %297, %v148
        %v299 = vpop.permute.xlu0 %298
        %301 = vset.pattern.permute.xlu0 1
        %302 = vperm.xlu0 %301, %v149
        %v303 = vpop.permute.xlu0 %302
        %305 = vset.pattern.permute.xlu0 1
        %306 = vperm.xlu0 %305, %v150
        %v307 = vpop.permute.xlu0 %306
        %309 = vset.pattern.permute.xlu0 1
        %310 = vperm.xlu0 %309, %v151
        %v311 = vpop.permute.xlu0 %310
        %313 = vset.pattern.permute.xlu0 1
        %314 = vperm.xlu0 %313, %v152
        %v315 = vpop.permute.xlu0 %314
        %317 = vset.pattern.permute.xlu0 1
        %318 = vperm.xlu0 %317, %v153
        %v319 = vpop.permute.xlu0 %318
        %321 = vset.pattern.permute.xlu0 1
        %322 = vperm.xlu0 %321, %v154
        %v323 = vpop.permute.xlu0 %322
        %325 = vset.pattern.permute.xlu0 1
        %326 = vperm.xlu0 %325, %v155
        %v327 = vpop.permute.xlu0 %326
        %329 = vset.pattern.permute.xlu0 1
        %330 = vperm.xlu0 %329, %v156
        %v331 = vpop.permute.xlu0 %330
        %333 = vset.pattern.permute.xlu0 1
        %334 = vperm.xlu0 %333, %v157
        %v335 = vpop.permute.xlu0 %334
        %337 = vset.pattern.permute.xlu0 1
        %338 = vperm.xlu0 %337, %v158
        %v339 = vpop.permute.xlu0 %338
        %341 = vset.pattern.permute.xlu0 1
        %342 = vperm.xlu0 %341, %v159
        %v343 = vpop.permute.xlu0 %342
        %345 = vset.pattern.permute.xlu0 1
        %346 = vperm.xlu0 %345, %v160
        %v347 = vpop.permute.xlu0 %346
        %v349 = vlaneseq
        %v350 = vshrl.u32 %v349, 7
        %v351 = vsub.s32 1, %v350
        %v352 = vrot.slane %v161, %v351
        %v353 = vmul.f32 %v287, %v352
        %v354 = vmul.f32 %v291, %v352
        %v355 = vmul.f32 %v295, %v352
        %v356 = vmul.f32 %v299, %v352
        %v357 = vmul.f32 %v303, %v352
        %v358 = vmul.f32 %v307, %v352
        %v359 = vmul.f32 %v311, %v352
        %v360 = vmul.f32 %v315, %v352
        %v361 = vmul.f32 %v319, %v352
        %v362 = vmul.f32 %v323, %v352
        %v363 = vmul.f32 %v327, %v352
        %v364 = vmul.f32 %v331, %v352
        %v365 = vmul.f32 %v335, %v352
        %v366 = vmul.f32 %v339, %v352
        %v367 = vmul.f32 %v343, %v352
        %v368 = vmul.f32 %v347, %v352
        %v369 = vadd.f32 %v269, %v353
        %v370 = vadd.f32 %v270, %v354
        %v371 = vadd.f32 %v271, %v355
        %v372 = vadd.f32 %v272, %v356
        %v373 = vadd.f32 %v273, %v357
        %v374 = vadd.f32 %v274, %v358
        %v375 = vadd.f32 %v275, %v359
        %v376 = vadd.f32 %v276, %v360
        %v377 = vadd.f32 %v277, %v361
        %v378 = vadd.f32 %v278, %v362
        %v379 = vadd.f32 %v279, %v363
        %v380 = vadd.f32 %v280, %v364
        %v381 = vadd.f32 %v281, %v365
        %v382 = vadd.f32 %v282, %v366
        %v383 = vadd.f32 %v283, %v367
        %v384 = vadd.f32 %v284, %v368
        %385 = vset.pattern.permute.xlu0 2
        %386 = vperm.xlu0 %385, %v145
        %v387 = vpop.permute.xlu0 %386
        %389 = vset.pattern.permute.xlu0 2
        %390 = vperm.xlu0 %389, %v146
        %v391 = vpop.permute.xlu0 %390
        %393 = vset.pattern.permute.xlu0 2
        %394 = vperm.xlu0 %393, %v147
        %v395 = vpop.permute.xlu0 %394
        %397 = vset.pattern.permute.xlu0 2
        %398 = vperm.xlu0 %397, %v148
        %v399 = vpop.permute.xlu0 %398
        %401 = vset.pattern.permute.xlu0 2
        %402 = vperm.xlu0 %401, %v149
        %v403 = vpop.permute.xlu0 %402
        %405 = vset.pattern.permute.xlu0 2
        %406 = vperm.xlu0 %405, %v150
        %v407 = vpop.permute.xlu0 %406
        %409 = vset.pattern.permute.xlu0 2
        %410 = vperm.xlu0 %409, %v151
        %v411 = vpop.permute.xlu0 %410
        %413 = vset.pattern.permute.xlu0 2
        %414 = vperm.xlu0 %413, %v152
        %v415 = vpop.permute.xlu0 %414
        %417 = vset.pattern.permute.xlu0 2
        %418 = vperm.xlu0 %417, %v153
        %v419 = vpop.permute.xlu0 %418
        %421 = vset.pattern.permute.xlu0 2
        %422 = vperm.xlu0 %421, %v154
        %v423 = vpop.permute.xlu0 %422
        %425 = vset.pattern.permute.xlu0 2
        %426 = vperm.xlu0 %425, %v155
        %v427 = vpop.permute.xlu0 %426
        %429 = vset.pattern.permute.xlu0 2
        %430 = vperm.xlu0 %429, %v156
        %v431 = vpop.permute.xlu0 %430
        %433 = vset.pattern.permute.xlu0 2
        %434 = vperm.xlu0 %433, %v157
        %v435 = vpop.permute.xlu0 %434
        %437 = vset.pattern.permute.xlu0 2
        %438 = vperm.xlu0 %437, %v158
        %v439 = vpop.permute.xlu0 %438
        %441 = vset.pattern.permute.xlu0 2
        %442 = vperm.xlu0 %441, %v159
        %v443 = vpop.permute.xlu0 %442
        %445 = vset.pattern.permute.xlu0 2
        %446 = vperm.xlu0 %445, %v160
        %v447 = vpop.permute.xlu0 %446
        %v449 = vlaneseq
        %v450 = vshrl.u32 %v449, 7
        %v451 = vsub.s32 2, %v450
        %v452 = vrot.slane %v161, %v451
        %v453 = vmul.f32 %v387, %v452
        %v454 = vmul.f32 %v391, %v452
        %v455 = vmul.f32 %v395, %v452
        %v456 = vmul.f32 %v399, %v452
        %v457 = vmul.f32 %v403, %v452
        %v458 = vmul.f32 %v407, %v452
        %v459 = vmul.f32 %v411, %v452
        %v460 = vmul.f32 %v415, %v452
        %v461 = vmul.f32 %v419, %v452
        %v462 = vmul.f32 %v423, %v452
        %v463 = vmul.f32 %v427, %v452
        %v464 = vmul.f32 %v431, %v452
        %v465 = vmul.f32 %v435, %v452
        %v466 = vmul.f32 %v439, %v452
        %v467 = vmul.f32 %v443, %v452
        %v468 = vmul.f32 %v447, %v452
        %v469 = vadd.f32 %v369, %v453
        %v470 = vadd.f32 %v370, %v454
        %v471 = vadd.f32 %v371, %v455
        %v472 = vadd.f32 %v372, %v456
        %v473 = vadd.f32 %v373, %v457
        %v474 = vadd.f32 %v374, %v458
        %v475 = vadd.f32 %v375, %v459
        %v476 = vadd.f32 %v376, %v460
        %v477 = vadd.f32 %v377, %v461
        %v478 = vadd.f32 %v378, %v462
        %v479 = vadd.f32 %v379, %v463
        %v480 = vadd.f32 %v380, %v464
        %v481 = vadd.f32 %v381, %v465
        %v482 = vadd.f32 %v382, %v466
        %v483 = vadd.f32 %v383, %v467
        %v484 = vadd.f32 %v384, %v468
        %485 = vset.pattern.permute.xlu0 3
        %486 = vperm.xlu0 %485, %v145
        %v487 = vpop.permute.xlu0 %486
        %489 = vset.pattern.permute.xlu0 3
        %490 = vperm.xlu0 %489, %v146
        %v491 = vpop.permute.xlu0 %490
        %493 = vset.pattern.permute.xlu0 3
        %494 = vperm.xlu0 %493, %v147
        %v495 = vpop.permute.xlu0 %494
        %497 = vset.pattern.permute.xlu0 3
        %498 = vperm.xlu0 %497, %v148
        %v499 = vpop.permute.xlu0 %498
        %501 = vset.pattern.permute.xlu0 3
        %502 = vperm.xlu0 %501, %v149
        %v503 = vpop.permute.xlu0 %502
        %505 = vset.pattern.permute.xlu0 3
        %506 = vperm.xlu0 %505, %v150
        %v507 = vpop.permute.xlu0 %506
        %509 = vset.pattern.permute.xlu0 3
        %510 = vperm.xlu0 %509, %v151
        %v511 = vpop.permute.xlu0 %510
        %513 = vset.pattern.permute.xlu0 3
        %514 = vperm.xlu0 %513, %v152
        %v515 = vpop.permute.xlu0 %514
        %517 = vset.pattern.permute.xlu0 3
        %518 = vperm.xlu0 %517, %v153
        %v519 = vpop.permute.xlu0 %518
        %521 = vset.pattern.permute.xlu0 3
        %522 = vperm.xlu0 %521, %v154
        %v523 = vpop.permute.xlu0 %522
        %525 = vset.pattern.permute.xlu0 3
        %526 = vperm.xlu0 %525, %v155
        %v527 = vpop.permute.xlu0 %526
        %529 = vset.pattern.permute.xlu0 3
        %530 = vperm.xlu0 %529, %v156
        %v531 = vpop.permute.xlu0 %530
        %533 = vset.pattern.permute.xlu0 3
        %534 = vperm.xlu0 %533, %v157
        %v535 = vpop.permute.xlu0 %534
        %537 = vset.pattern.permute.xlu0 3
        %538 = vperm.xlu0 %537, %v158
        %v539 = vpop.permute.xlu0 %538
        %541 = vset.pattern.permute.xlu0 3
        %542 = vperm.xlu0 %541, %v159
        %v543 = vpop.permute.xlu0 %542
        %545 = vset.pattern.permute.xlu0 3
        %546 = vperm.xlu0 %545, %v160
        %v547 = vpop.permute.xlu0 %546
        %v549 = vlaneseq
        %v550 = vshrl.u32 %v549, 7
        %v551 = vsub.s32 3, %v550
        %v552 = vrot.slane %v161, %v551
        %v553 = vmul.f32 %v487, %v552
        %v554 = vmul.f32 %v491, %v552
        %v555 = vmul.f32 %v495, %v552
        %v556 = vmul.f32 %v499, %v552
        %v557 = vmul.f32 %v503, %v552
        %v558 = vmul.f32 %v507, %v552
        %v559 = vmul.f32 %v511, %v552
        %v560 = vmul.f32 %v515, %v552
        %v561 = vmul.f32 %v519, %v552
        %v562 = vmul.f32 %v523, %v552
        %v563 = vmul.f32 %v527, %v552
        %v564 = vmul.f32 %v531, %v552
        %v565 = vmul.f32 %v535, %v552
        %v566 = vmul.f32 %v539, %v552
        %v567 = vmul.f32 %v543, %v552
        %v568 = vmul.f32 %v547, %v552
        %v569 = vadd.f32 %v469, %v553
        %v570 = vadd.f32 %v470, %v554
        %v571 = vadd.f32 %v471, %v555
        %v572 = vadd.f32 %v472, %v556
        %v573 = vadd.f32 %v473, %v557
        %v574 = vadd.f32 %v474, %v558
        %v575 = vadd.f32 %v475, %v559
        %v576 = vadd.f32 %v476, %v560
        %v577 = vadd.f32 %v477, %v561
        %v578 = vadd.f32 %v478, %v562
        %v579 = vadd.f32 %v479, %v563
        %v580 = vadd.f32 %v480, %v564
        %v581 = vadd.f32 %v481, %v565
        %v582 = vadd.f32 %v482, %v566
        %v583 = vadd.f32 %v483, %v567
        %v584 = vadd.f32 %v484, %v568
        %v585 = vmax.f32 %v569, 0.0
        %v586 = vmax.f32 %v570, 0.0
        %v587 = vmax.f32 %v571, 0.0
        %v588 = vmax.f32 %v572, 0.0
        %v589 = vmax.f32 %v573, 0.0
        %v590 = vmax.f32 %v574, 0.0
        %v591 = vmax.f32 %v575, 0.0
        %v592 = vmax.f32 %v576, 0.0
        %v593 = vmax.f32 %v577, 0.0
        %v594 = vmax.f32 %v578, 0.0
        %v595 = vmax.f32 %v579, 0.0
        %v596 = vmax.f32 %v580, 0.0
        %v597 = vmax.f32 %v581, 0.0
        %v598 = vmax.f32 %v582, 0.0
        %v599 = vmax.f32 %v583, 0.0
        %v600 = vmax.f32 %v584, 0.0
        %v601 = vlaneseq
        %v602 = vshrl.u32 %v601, 7
        %v603 = vsub.s32 5, %v602
        %v604 = vrot.slane %v164, %v603
        %606 = vset.pattern.permute.xlu0 0
        %607 = vperm.xlu0 %606, %v585
        %v608 = vpop.permute.xlu0 %607
        %611 = vset.pattern.permute.xlu0 0
        %612 = vperm.xlu0 %611, %v586
        %v613 = vpop.permute.xlu0 %612
        %616 = vset.pattern.permute.xlu0 0
        %617 = vperm.xlu0 %616, %v587
        %v618 = vpop.permute.xlu0 %617
        %621 = vset.pattern.permute.xlu0 0
        %622 = vperm.xlu0 %621, %v588
        %v623 = vpop.permute.xlu0 %622
        %626 = vset.pattern.permute.xlu0 0
        %627 = vperm.xlu0 %626, %v589
        %v628 = vpop.permute.xlu0 %627
        %631 = vset.pattern.permute.xlu0 0
        %632 = vperm.xlu0 %631, %v590
        %v633 = vpop.permute.xlu0 %632
        %636 = vset.pattern.permute.xlu0 0
        %637 = vperm.xlu0 %636, %v591
        %v638 = vpop.permute.xlu0 %637
        %641 = vset.pattern.permute.xlu0 0
        %642 = vperm.xlu0 %641, %v592
        %v643 = vpop.permute.xlu0 %642
        %646 = vset.pattern.permute.xlu0 0
        %647 = vperm.xlu0 %646, %v593
        %v648 = vpop.permute.xlu0 %647
        %651 = vset.pattern.permute.xlu0 0
        %652 = vperm.xlu0 %651, %v594
        %v653 = vpop.permute.xlu0 %652
        %656 = vset.pattern.permute.xlu0 0
        %657 = vperm.xlu0 %656, %v595
        %v658 = vpop.permute.xlu0 %657
        %661 = vset.pattern.permute.xlu0 0
        %662 = vperm.xlu0 %661, %v596
        %v663 = vpop.permute.xlu0 %662
        %666 = vset.pattern.permute.xlu0 0
        %667 = vperm.xlu0 %666, %v597
        %v668 = vpop.permute.xlu0 %667
        %671 = vset.pattern.permute.xlu0 0
        %672 = vperm.xlu0 %671, %v598
        %v673 = vpop.permute.xlu0 %672
        %676 = vset.pattern.permute.xlu0 0
        %677 = vperm.xlu0 %676, %v599
        %v678 = vpop.permute.xlu0 %677
        %681 = vset.pattern.permute.xlu0 0
        %682 = vperm.xlu0 %681, %v600
        %v683 = vpop.permute.xlu0 %682
        %v685 = vlaneseq
        %v686 = vshrl.u32 %v685, 7
        %v687 = vsub.s32 4, %v686
        %v688 = vrot.slane %v161, %v687
        %v689 = vmul.f32 %v608, %v688
        %v690 = vmul.f32 %v613, %v688
        %v691 = vmul.f32 %v618, %v688
        %v692 = vmul.f32 %v623, %v688
        %v693 = vmul.f32 %v628, %v688
        %v694 = vmul.f32 %v633, %v688
        %v695 = vmul.f32 %v638, %v688
        %v696 = vmul.f32 %v643, %v688
        %v697 = vmul.f32 %v648, %v688
        %v698 = vmul.f32 %v653, %v688
        %v699 = vmul.f32 %v658, %v688
        %v700 = vmul.f32 %v663, %v688
        %v701 = vmul.f32 %v668, %v688
        %v702 = vmul.f32 %v673, %v688
        %v703 = vmul.f32 %v678, %v688
        %v704 = vmul.f32 %v683, %v688
        %v705 = vadd.f32 %v604, %v689
        %v706 = vadd.f32 %v604, %v690
        %v707 = vadd.f32 %v604, %v691
        %v708 = vadd.f32 %v604, %v692
        %v709 = vadd.f32 %v604, %v693
        %v710 = vadd.f32 %v604, %v694
        %v711 = vadd.f32 %v604, %v695
        %v712 = vadd.f32 %v604, %v696
        %v713 = vadd.f32 %v604, %v697
        %v714 = vadd.f32 %v604, %v698
        %v715 = vadd.f32 %v604, %v699
        %v716 = vadd.f32 %v604, %v700
        %v717 = vadd.f32 %v604, %v701
        %v718 = vadd.f32 %v604, %v702
        %v719 = vadd.f32 %v604, %v703
        %v720 = vadd.f32 %v604, %v704
        %721 = vset.pattern.permute.xlu0 1
        %722 = vperm.xlu0 %721, %v585
        %v723 = vpop.permute.xlu0 %722
        %725 = vset.pattern.permute.xlu0 1
        %726 = vperm.xlu0 %725, %v586
        %v727 = vpop.permute.xlu0 %726
        %729 = vset.pattern.permute.xlu0 1
        %730 = vperm.xlu0 %729, %v587
        %v731 = vpop.permute.xlu0 %730
        %733 = vset.pattern.permute.xlu0 1
        %734 = vperm.xlu0 %733, %v588
        %v735 = vpop.permute.xlu0 %734
        %737 = vset.pattern.permute.xlu0 1
        %738 = vperm.xlu0 %737, %v589
        %v739 = vpop.permute.xlu0 %738
        %741 = vset.pattern.permute.xlu0 1
        %742 = vperm.xlu0 %741, %v590
        %v743 = vpop.permute.xlu0 %742
        %745 = vset.pattern.permute.xlu0 1
        %746 = vperm.xlu0 %745, %v591
        %v747 = vpop.permute.xlu0 %746
        %749 = vset.pattern.permute.xlu0 1
        %750 = vperm.xlu0 %749, %v592
        %v751 = vpop.permute.xlu0 %750
        %753 = vset.pattern.permute.xlu0 1
        %754 = vperm.xlu0 %753, %v593
        %v755 = vpop.permute.xlu0 %754
        %757 = vset.pattern.permute.xlu0 1
        %758 = vperm.xlu0 %757, %v594
        %v759 = vpop.permute.xlu0 %758
        %761 = vset.pattern.permute.xlu0 1
        %762 = vperm.xlu0 %761, %v595
        %v763 = vpop.permute.xlu0 %762
        %765 = vset.pattern.permute.xlu0 1
        %766 = vperm.xlu0 %765, %v596
        %v767 = vpop.permute.xlu0 %766
        %769 = vset.pattern.permute.xlu0 1
        %770 = vperm.xlu0 %769, %v597
        %v771 = vpop.permute.xlu0 %770
        %773 = vset.pattern.permute.xlu0 1
        %774 = vperm.xlu0 %773, %v598
        %v775 = vpop.permute.xlu0 %774
        %777 = vset.pattern.permute.xlu0 1
        %778 = vperm.xlu0 %777, %v599
        %v779 = vpop.permute.xlu0 %778
        %781 = vset.pattern.permute.xlu0 1
        %782 = vperm.xlu0 %781, %v600
        %v783 = vpop.permute.xlu0 %782
        %v785 = vlaneseq
        %v786 = vshrl.u32 %v785, 7
        %v787 = vsub.s32 5, %v786
        %v788 = vrot.slane %v161, %v787
        %v789 = vmul.f32 %v723, %v788
        %v790 = vmul.f32 %v727, %v788
        %v791 = vmul.f32 %v731, %v788
        %v792 = vmul.f32 %v735, %v788
        %v793 = vmul.f32 %v739, %v788
        %v794 = vmul.f32 %v743, %v788
        %v795 = vmul.f32 %v747, %v788
        %v796 = vmul.f32 %v751, %v788
        %v797 = vmul.f32 %v755, %v788
        %v798 = vmul.f32 %v759, %v788
        %v799 = vmul.f32 %v763, %v788
        %v800 = vmul.f32 %v767, %v788
        %v801 = vmul.f32 %v771, %v788
        %v802 = vmul.f32 %v775, %v788
        %v803 = vmul.f32 %v779, %v788
        %v804 = vmul.f32 %v783, %v788
        %v805 = vadd.f32 %v705, %v789
        %v806 = vadd.f32 %v706, %v790
        %v807 = vadd.f32 %v707, %v791
        %v808 = vadd.f32 %v708, %v792
        %v809 = vadd.f32 %v709, %v793
        %v810 = vadd.f32 %v710, %v794
        %v811 = vadd.f32 %v711, %v795
        %v812 = vadd.f32 %v712, %v796
        %v813 = vadd.f32 %v713, %v797
        %v814 = vadd.f32 %v714, %v798
        %v815 = vadd.f32 %v715, %v799
        %v816 = vadd.f32 %v716, %v800
        %v817 = vadd.f32 %v717, %v801
        %v818 = vadd.f32 %v718, %v802
        %v819 = vadd.f32 %v719, %v803
        %v820 = vadd.f32 %v720, %v804
        %821 = vset.pattern.permute.xlu0 2
        %822 = vperm.xlu0 %821, %v585
        %v823 = vpop.permute.xlu0 %822
        %825 = vset.pattern.permute.xlu0 2
        %826 = vperm.xlu0 %825, %v586
        %v827 = vpop.permute.xlu0 %826
        %829 = vset.pattern.permute.xlu0 2
        %830 = vperm.xlu0 %829, %v587
        %v831 = vpop.permute.xlu0 %830
        %833 = vset.pattern.permute.xlu0 2
        %834 = vperm.xlu0 %833, %v588
        %v835 = vpop.permute.xlu0 %834
        %837 = vset.pattern.permute.xlu0 2
        %838 = vperm.xlu0 %837, %v589
        %v839 = vpop.permute.xlu0 %838
        %841 = vset.pattern.permute.xlu0 2
        %842 = vperm.xlu0 %841, %v590
        %v843 = vpop.permute.xlu0 %842
        %845 = vset.pattern.permute.xlu0 2
        %846 = vperm.xlu0 %845, %v591
        %v847 = vpop.permute.xlu0 %846
        %849 = vset.pattern.permute.xlu0 2
        %850 = vperm.xlu0 %849, %v592
        %v851 = vpop.permute.xlu0 %850
        %853 = vset.pattern.permute.xlu0 2
        %854 = vperm.xlu0 %853, %v593
        %v855 = vpop.permute.xlu0 %854
        %857 = vset.pattern.permute.xlu0 2
        %858 = vperm.xlu0 %857, %v594
        %v859 = vpop.permute.xlu0 %858
        %861 = vset.pattern.permute.xlu0 2
        %862 = vperm.xlu0 %861, %v595
        %v863 = vpop.permute.xlu0 %862
        %865 = vset.pattern.permute.xlu0 2
        %866 = vperm.xlu0 %865, %v596
        %v867 = vpop.permute.xlu0 %866
        %869 = vset.pattern.permute.xlu0 2
        %870 = vperm.xlu0 %869, %v597
        %v871 = vpop.permute.xlu0 %870
        %873 = vset.pattern.permute.xlu0 2
        %874 = vperm.xlu0 %873, %v598
        %v875 = vpop.permute.xlu0 %874
        %877 = vset.pattern.permute.xlu0 2
        %878 = vperm.xlu0 %877, %v599
        %v879 = vpop.permute.xlu0 %878
        %881 = vset.pattern.permute.xlu0 2
        %882 = vperm.xlu0 %881, %v600
        %v883 = vpop.permute.xlu0 %882
        %v885 = vlaneseq
        %v886 = vshrl.u32 %v885, 7
        %v887 = vsub.s32 6, %v886
        %v888 = vrot.slane %v161, %v887
        %v889 = vmul.f32 %v823, %v888
        %v890 = vmul.f32 %v827, %v888
        %v891 = vmul.f32 %v831, %v888
        %v892 = vmul.f32 %v835, %v888
        %v893 = vmul.f32 %v839, %v888
        %v894 = vmul.f32 %v843, %v888
        %v895 = vmul.f32 %v847, %v888
        %v896 = vmul.f32 %v851, %v888
        %v897 = vmul.f32 %v855, %v888
        %v898 = vmul.f32 %v859, %v888
        %v899 = vmul.f32 %v863, %v888
        %v900 = vmul.f32 %v867, %v888
        %v901 = vmul.f32 %v871, %v888
        %v902 = vmul.f32 %v875, %v888
        %v903 = vmul.f32 %v879, %v888
        %v904 = vmul.f32 %v883, %v888
        %v905 = vadd.f32 %v805, %v889
        %v906 = vadd.f32 %v806, %v890
        %v907 = vadd.f32 %v807, %v891
        %v908 = vadd.f32 %v808, %v892
        %v909 = vadd.f32 %v809, %v893
        %v910 = vadd.f32 %v810, %v894
        %v911 = vadd.f32 %v811, %v895
        %v912 = vadd.f32 %v812, %v896
        %v913 = vadd.f32 %v813, %v897
        %v914 = vadd.f32 %v814, %v898
        %v915 = vadd.f32 %v815, %v899
        %v916 = vadd.f32 %v816, %v900
        %v917 = vadd.f32 %v817, %v901
        %v918 = vadd.f32 %v818, %v902
        %v919 = vadd.f32 %v819, %v903
        %v920 = vadd.f32 %v820, %v904
        %921 = vset.pattern.permute.xlu0 3
        %922 = vperm.xlu0 %921, %v585
        %v923 = vpop.permute.xlu0 %922
        %925 = vset.pattern.permute.xlu0 3
        %926 = vperm.xlu0 %925, %v586
        %v927 = vpop.permute.xlu0 %926
        %929 = vset.pattern.permute.xlu0 3
        %930 = vperm.xlu0 %929, %v587
        %v931 = vpop.permute.xlu0 %930
        %933 = vset.pattern.permute.xlu0 3
        %934 = vperm.xlu0 %933, %v588
        %v935 = vpop.permute.xlu0 %934
        %937 = vset.pattern.permute.xlu0 3
        %938 = vperm.xlu0 %937, %v589
        %v939 = vpop.permute.xlu0 %938
        %941 = vset.pattern.permute.xlu0 3
        %942 = vperm.xlu0 %941, %v590
        %v943 = vpop.permute.xlu0 %942
        %945 = vset.pattern.permute.xlu0 3
        %946 = vperm.xlu0 %945, %v591
        %v947 = vpop.permute.xlu0 %946
        %949 = vset.pattern.permute.xlu0 3
        %950 = vperm.xlu0 %949, %v592
        %v951 = vpop.permute.xlu0 %950
        %953 = vset.pattern.permute.xlu0 3
        %954 = vperm.xlu0 %953, %v593
        %v955 = vpop.permute.xlu0 %954
        %957 = vset.pattern.permute.xlu0 3
        %958 = vperm.xlu0 %957, %v594
        %v959 = vpop.permute.xlu0 %958
        %961 = vset.pattern.permute.xlu0 3
        %962 = vperm.xlu0 %961, %v595
        %v963 = vpop.permute.xlu0 %962
        %965 = vset.pattern.permute.xlu0 3
        %966 = vperm.xlu0 %965, %v596
        %v967 = vpop.permute.xlu0 %966
        %969 = vset.pattern.permute.xlu0 3
        %970 = vperm.xlu0 %969, %v597
        %v971 = vpop.permute.xlu0 %970
        %973 = vset.pattern.permute.xlu0 3
        %974 = vperm.xlu0 %973, %v598
        %v975 = vpop.permute.xlu0 %974
        %977 = vset.pattern.permute.xlu0 3
        %978 = vperm.xlu0 %977, %v599
        %v979 = vpop.permute.xlu0 %978
        %981 = vset.pattern.permute.xlu0 3
        %982 = vperm.xlu0 %981, %v600
        %v983 = vpop.permute.xlu0 %982
        %v985 = vlaneseq
        %v986 = vshrl.u32 %v985, 7
        %v987 = vsub.s32 7, %v986
        %v988 = vrot.slane %v161, %v987
        %v989 = vmul.f32 %v923, %v988
        %v990 = vmul.f32 %v927, %v988
        %v991 = vmul.f32 %v931, %v988
        %v992 = vmul.f32 %v935, %v988
        %v993 = vmul.f32 %v939, %v988
        %v994 = vmul.f32 %v943, %v988
        %v995 = vmul.f32 %v947, %v988
        %v996 = vmul.f32 %v951, %v988
        %v997 = vmul.f32 %v955, %v988
        %v998 = vmul.f32 %v959, %v988
        %v999 = vmul.f32 %v963, %v988
        %v1000 = vmul.f32 %v967, %v988
        %v1001 = vmul.f32 %v971, %v988
        %v1002 = vmul.f32 %v975, %v988
        %v1003 = vmul.f32 %v979, %v988
        %v1004 = vmul.f32 %v983, %v988
        %v1005 = vadd.f32 %v905, %v989
        %v1006 = vadd.f32 %v906, %v990
        %v1007 = vadd.f32 %v907, %v991
        %v1008 = vadd.f32 %v908, %v992
        %v1009 = vadd.f32 %v909, %v993
        %v1010 = vadd.f32 %v910, %v994
        %v1011 = vadd.f32 %v911, %v995
        %v1012 = vadd.f32 %v912, %v996
        %v1013 = vadd.f32 %v913, %v997
        %v1014 = vadd.f32 %v914, %v998
        %v1015 = vadd.f32 %v915, %v999
        %v1016 = vadd.f32 %v916, %v1000
        %v1017 = vadd.f32 %v917, %v1001
        %v1018 = vadd.f32 %v918, %v1002
        %v1019 = vadd.f32 %v919, %v1003
        %v1020 = vadd.f32 %v920, %v1004
        %1021 = vset.pattern.permute.xlu0 4
        %1022 = vperm.xlu0 %1021, %v585
        %v1023 = vpop.permute.xlu0 %1022
        %1025 = vset.pattern.permute.xlu0 4
        %1026 = vperm.xlu0 %1025, %v586
        %v1027 = vpop.permute.xlu0 %1026
        %1029 = vset.pattern.permute.xlu0 4
        %1030 = vperm.xlu0 %1029, %v587
        %v1031 = vpop.permute.xlu0 %1030
        %1033 = vset.pattern.permute.xlu0 4
        %1034 = vperm.xlu0 %1033, %v588
        %v1035 = vpop.permute.xlu0 %1034
        %1037 = vset.pattern.permute.xlu0 4
        %1038 = vperm.xlu0 %1037, %v589
        %v1039 = vpop.permute.xlu0 %1038
        %1041 = vset.pattern.permute.xlu0 4
        %1042 = vperm.xlu0 %1041, %v590
        %v1043 = vpop.permute.xlu0 %1042
        %1045 = vset.pattern.permute.xlu0 4
        %1046 = vperm.xlu0 %1045, %v591
        %v1047 = vpop.permute.xlu0 %1046
        %1049 = vset.pattern.permute.xlu0 4
        %1050 = vperm.xlu0 %1049, %v592
        %v1051 = vpop.permute.xlu0 %1050
        %1053 = vset.pattern.permute.xlu0 4
        %1054 = vperm.xlu0 %1053, %v593
        %v1055 = vpop.permute.xlu0 %1054
        %1057 = vset.pattern.permute.xlu0 4
        %1058 = vperm.xlu0 %1057, %v594
        %v1059 = vpop.permute.xlu0 %1058
        %1061 = vset.pattern.permute.xlu0 4
        %1062 = vperm.xlu0 %1061, %v595
        %v1063 = vpop.permute.xlu0 %1062
        %1065 = vset.pattern.permute.xlu0 4
        %1066 = vperm.xlu0 %1065, %v596
        %v1067 = vpop.permute.xlu0 %1066
        %1069 = vset.pattern.permute.xlu0 4
        %1070 = vperm.xlu0 %1069, %v597
        %v1071 = vpop.permute.xlu0 %1070
        %1073 = vset.pattern.permute.xlu0 4
        %1074 = vperm.xlu0 %1073, %v598
        %v1075 = vpop.permute.xlu0 %1074
        %1077 = vset.pattern.permute.xlu0 4
        %1078 = vperm.xlu0 %1077, %v599
        %v1079 = vpop.permute.xlu0 %1078
        %1081 = vset.pattern.permute.xlu0 4
        %1082 = vperm.xlu0 %1081, %v600
        %v1083 = vpop.permute.xlu0 %1082
        %v1085 = vlaneseq
        %v1086 = vshrl.u32 %v1085, 7
        %v1087 = vsub.s32 0, %v1086
        %v1088 = vrot.slane %v162, %v1087
        %v1089 = vmul.f32 %v1023, %v1088
        %v1090 = vmul.f32 %v1027, %v1088
        %v1091 = vmul.f32 %v1031, %v1088
        %v1092 = vmul.f32 %v1035, %v1088
        %v1093 = vmul.f32 %v1039, %v1088
        %v1094 = vmul.f32 %v1043, %v1088
        %v1095 = vmul.f32 %v1047, %v1088
        %v1096 = vmul.f32 %v1051, %v1088
        %v1097 = vmul.f32 %v1055, %v1088
        %v1098 = vmul.f32 %v1059, %v1088
        %v1099 = vmul.f32 %v1063, %v1088
        %v1100 = vmul.f32 %v1067, %v1088
        %v1101 = vmul.f32 %v1071, %v1088
        %v1102 = vmul.f32 %v1075, %v1088
        %v1103 = vmul.f32 %v1079, %v1088
        %v1104 = vmul.f32 %v1083, %v1088
        %v1105 = vadd.f32 %v1005, %v1089
        %v1106 = vadd.f32 %v1006, %v1090
        %v1107 = vadd.f32 %v1007, %v1091
        %v1108 = vadd.f32 %v1008, %v1092
        %v1109 = vadd.f32 %v1009, %v1093
        %v1110 = vadd.f32 %v1010, %v1094
        %v1111 = vadd.f32 %v1011, %v1095
        %v1112 = vadd.f32 %v1012, %v1096
        %v1113 = vadd.f32 %v1013, %v1097
        %v1114 = vadd.f32 %v1014, %v1098
        %v1115 = vadd.f32 %v1015, %v1099
        %v1116 = vadd.f32 %v1016, %v1100
        %v1117 = vadd.f32 %v1017, %v1101
        %v1118 = vadd.f32 %v1018, %v1102
        %v1119 = vadd.f32 %v1019, %v1103
        %v1120 = vadd.f32 %v1020, %v1104
        %1121 = vset.pattern.permute.xlu0 5
        %1122 = vperm.xlu0 %1121, %v585
        %v1123 = vpop.permute.xlu0 %1122
        %1125 = vset.pattern.permute.xlu0 5
        %1126 = vperm.xlu0 %1125, %v586
        %v1127 = vpop.permute.xlu0 %1126
        %1129 = vset.pattern.permute.xlu0 5
        %1130 = vperm.xlu0 %1129, %v587
        %v1131 = vpop.permute.xlu0 %1130
        %1133 = vset.pattern.permute.xlu0 5
        %1134 = vperm.xlu0 %1133, %v588
        %v1135 = vpop.permute.xlu0 %1134
        %1137 = vset.pattern.permute.xlu0 5
        %1138 = vperm.xlu0 %1137, %v589
        %v1139 = vpop.permute.xlu0 %1138
        %1141 = vset.pattern.permute.xlu0 5
        %1142 = vperm.xlu0 %1141, %v590
        %v1143 = vpop.permute.xlu0 %1142
        %1145 = vset.pattern.permute.xlu0 5
        %1146 = vperm.xlu0 %1145, %v591
        %v1147 = vpop.permute.xlu0 %1146
        %1149 = vset.pattern.permute.xlu0 5
        %1150 = vperm.xlu0 %1149, %v592
        %v1151 = vpop.permute.xlu0 %1150
        %1153 = vset.pattern.permute.xlu0 5
        %1154 = vperm.xlu0 %1153, %v593
        %v1155 = vpop.permute.xlu0 %1154
        %1157 = vset.pattern.permute.xlu0 5
        %1158 = vperm.xlu0 %1157, %v594
        %v1159 = vpop.permute.xlu0 %1158
        %1161 = vset.pattern.permute.xlu0 5
        %1162 = vperm.xlu0 %1161, %v595
        %v1163 = vpop.permute.xlu0 %1162
        %1165 = vset.pattern.permute.xlu0 5
        %1166 = vperm.xlu0 %1165, %v596
        %v1167 = vpop.permute.xlu0 %1166
        %1169 = vset.pattern.permute.xlu0 5
        %1170 = vperm.xlu0 %1169, %v597
        %v1171 = vpop.permute.xlu0 %1170
        %1173 = vset.pattern.permute.xlu0 5
        %1174 = vperm.xlu0 %1173, %v598
        %v1175 = vpop.permute.xlu0 %1174
        %1177 = vset.pattern.permute.xlu0 5
        %1178 = vperm.xlu0 %1177, %v599
        %v1179 = vpop.permute.xlu0 %1178
        %1181 = vset.pattern.permute.xlu0 5
        %1182 = vperm.xlu0 %1181, %v600
        %v1183 = vpop.permute.xlu0 %1182
        %v1185 = vlaneseq
        %v1186 = vshrl.u32 %v1185, 7
        %v1187 = vsub.s32 1, %v1186
        %v1188 = vrot.slane %v162, %v1187
        %v1189 = vmul.f32 %v1123, %v1188
        %v1190 = vmul.f32 %v1127, %v1188
        %v1191 = vmul.f32 %v1131, %v1188
        %v1192 = vmul.f32 %v1135, %v1188
        %v1193 = vmul.f32 %v1139, %v1188
        %v1194 = vmul.f32 %v1143, %v1188
        %v1195 = vmul.f32 %v1147, %v1188
        %v1196 = vmul.f32 %v1151, %v1188
        %v1197 = vmul.f32 %v1155, %v1188
        %v1198 = vmul.f32 %v1159, %v1188
        %v1199 = vmul.f32 %v1163, %v1188
        %v1200 = vmul.f32 %v1167, %v1188
        %v1201 = vmul.f32 %v1171, %v1188
        %v1202 = vmul.f32 %v1175, %v1188
        %v1203 = vmul.f32 %v1179, %v1188
        %v1204 = vmul.f32 %v1183, %v1188
        %v1205 = vadd.f32 %v1105, %v1189
        %v1206 = vadd.f32 %v1106, %v1190
        %v1207 = vadd.f32 %v1107, %v1191
        %v1208 = vadd.f32 %v1108, %v1192
        %v1209 = vadd.f32 %v1109, %v1193
        %v1210 = vadd.f32 %v1110, %v1194
        %v1211 = vadd.f32 %v1111, %v1195
        %v1212 = vadd.f32 %v1112, %v1196
        %v1213 = vadd.f32 %v1113, %v1197
        %v1214 = vadd.f32 %v1114, %v1198
        %v1215 = vadd.f32 %v1115, %v1199
        %v1216 = vadd.f32 %v1116, %v1200
        %v1217 = vadd.f32 %v1117, %v1201
        %v1218 = vadd.f32 %v1118, %v1202
        %v1219 = vadd.f32 %v1119, %v1203
        %v1220 = vadd.f32 %v1120, %v1204
        %1221 = vset.pattern.permute.xlu0 6
        %1222 = vperm.xlu0 %1221, %v585
        %v1223 = vpop.permute.xlu0 %1222
        %1225 = vset.pattern.permute.xlu0 6
        %1226 = vperm.xlu0 %1225, %v586
        %v1227 = vpop.permute.xlu0 %1226
        %1229 = vset.pattern.permute.xlu0 6
        %1230 = vperm.xlu0 %1229, %v587
        %v1231 = vpop.permute.xlu0 %1230
        %1233 = vset.pattern.permute.xlu0 6
        %1234 = vperm.xlu0 %1233, %v588
        %v1235 = vpop.permute.xlu0 %1234
        %1237 = vset.pattern.permute.xlu0 6
        %1238 = vperm.xlu0 %1237, %v589
        %v1239 = vpop.permute.xlu0 %1238
        %1241 = vset.pattern.permute.xlu0 6
        %1242 = vperm.xlu0 %1241, %v590
        %v1243 = vpop.permute.xlu0 %1242
        %1245 = vset.pattern.permute.xlu0 6
        %1246 = vperm.xlu0 %1245, %v591
        %v1247 = vpop.permute.xlu0 %1246
        %1249 = vset.pattern.permute.xlu0 6
        %1250 = vperm.xlu0 %1249, %v592
        %v1251 = vpop.permute.xlu0 %1250
        %1253 = vset.pattern.permute.xlu0 6
        %1254 = vperm.xlu0 %1253, %v593
        %v1255 = vpop.permute.xlu0 %1254
        %1257 = vset.pattern.permute.xlu0 6
        %1258 = vperm.xlu0 %1257, %v594
        %v1259 = vpop.permute.xlu0 %1258
        %1261 = vset.pattern.permute.xlu0 6
        %1262 = vperm.xlu0 %1261, %v595
        %v1263 = vpop.permute.xlu0 %1262
        %1265 = vset.pattern.permute.xlu0 6
        %1266 = vperm.xlu0 %1265, %v596
        %v1267 = vpop.permute.xlu0 %1266
        %1269 = vset.pattern.permute.xlu0 6
        %1270 = vperm.xlu0 %1269, %v597
        %v1271 = vpop.permute.xlu0 %1270
        %1273 = vset.pattern.permute.xlu0 6
        %1274 = vperm.xlu0 %1273, %v598
        %v1275 = vpop.permute.xlu0 %1274
        %1277 = vset.pattern.permute.xlu0 6
        %1278 = vperm.xlu0 %1277, %v599
        %v1279 = vpop.permute.xlu0 %1278
        %1281 = vset.pattern.permute.xlu0 6
        %1282 = vperm.xlu0 %1281, %v600
        %v1283 = vpop.permute.xlu0 %1282
        %v1285 = vlaneseq
        %v1286 = vshrl.u32 %v1285, 7
        %v1287 = vsub.s32 2, %v1286
        %v1288 = vrot.slane %v162, %v1287
        %v1289 = vmul.f32 %v1223, %v1288
        %v1290 = vmul.f32 %v1227, %v1288
        %v1291 = vmul.f32 %v1231, %v1288
        %v1292 = vmul.f32 %v1235, %v1288
        %v1293 = vmul.f32 %v1239, %v1288
        %v1294 = vmul.f32 %v1243, %v1288
        %v1295 = vmul.f32 %v1247, %v1288
        %v1296 = vmul.f32 %v1251, %v1288
        %v1297 = vmul.f32 %v1255, %v1288
        %v1298 = vmul.f32 %v1259, %v1288
        %v1299 = vmul.f32 %v1263, %v1288
        %v1300 = vmul.f32 %v1267, %v1288
        %v1301 = vmul.f32 %v1271, %v1288
        %v1302 = vmul.f32 %v1275, %v1288
        %v1303 = vmul.f32 %v1279, %v1288
        %v1304 = vmul.f32 %v1283, %v1288
        %v1305 = vadd.f32 %v1205, %v1289
        %v1306 = vadd.f32 %v1206, %v1290
        %v1307 = vadd.f32 %v1207, %v1291
        %v1308 = vadd.f32 %v1208, %v1292
        %v1309 = vadd.f32 %v1209, %v1293
        %v1310 = vadd.f32 %v1210, %v1294
        %v1311 = vadd.f32 %v1211, %v1295
        %v1312 = vadd.f32 %v1212, %v1296
        %v1313 = vadd.f32 %v1213, %v1297
        %v1314 = vadd.f32 %v1214, %v1298
        %v1315 = vadd.f32 %v1215, %v1299
        %v1316 = vadd.f32 %v1216, %v1300
        %v1317 = vadd.f32 %v1217, %v1301
        %v1318 = vadd.f32 %v1218, %v1302
        %v1319 = vadd.f32 %v1219, %v1303
        %v1320 = vadd.f32 %v1220, %v1304
        %1321 = vset.pattern.permute.xlu0 7
        %1322 = vperm.xlu0 %1321, %v585
        %v1323 = vpop.permute.xlu0 %1322
        %1325 = vset.pattern.permute.xlu0 7
        %1326 = vperm.xlu0 %1325, %v586
        %v1327 = vpop.permute.xlu0 %1326
        %1329 = vset.pattern.permute.xlu0 7
        %1330 = vperm.xlu0 %1329, %v587
        %v1331 = vpop.permute.xlu0 %1330
        %1333 = vset.pattern.permute.xlu0 7
        %1334 = vperm.xlu0 %1333, %v588
        %v1335 = vpop.permute.xlu0 %1334
        %1337 = vset.pattern.permute.xlu0 7
        %1338 = vperm.xlu0 %1337, %v589
        %v1339 = vpop.permute.xlu0 %1338
        %1341 = vset.pattern.permute.xlu0 7
        %1342 = vperm.xlu0 %1341, %v590
        %v1343 = vpop.permute.xlu0 %1342
        %1345 = vset.pattern.permute.xlu0 7
        %1346 = vperm.xlu0 %1345, %v591
        %v1347 = vpop.permute.xlu0 %1346
        %1349 = vset.pattern.permute.xlu0 7
        %1350 = vperm.xlu0 %1349, %v592
        %v1351 = vpop.permute.xlu0 %1350
        %1353 = vset.pattern.permute.xlu0 7
        %1354 = vperm.xlu0 %1353, %v593
        %v1355 = vpop.permute.xlu0 %1354
        %1357 = vset.pattern.permute.xlu0 7
        %1358 = vperm.xlu0 %1357, %v594
        %v1359 = vpop.permute.xlu0 %1358
        %1361 = vset.pattern.permute.xlu0 7
        %1362 = vperm.xlu0 %1361, %v595
        %v1363 = vpop.permute.xlu0 %1362
        %1365 = vset.pattern.permute.xlu0 7
        %1366 = vperm.xlu0 %1365, %v596
        %v1367 = vpop.permute.xlu0 %1366
        %1369 = vset.pattern.permute.xlu0 7
        %1370 = vperm.xlu0 %1369, %v597
        %v1371 = vpop.permute.xlu0 %1370
        %1373 = vset.pattern.permute.xlu0 7
        %1374 = vperm.xlu0 %1373, %v598
        %v1375 = vpop.permute.xlu0 %1374
        %1377 = vset.pattern.permute.xlu0 7
        %1378 = vperm.xlu0 %1377, %v599
        %v1379 = vpop.permute.xlu0 %1378
        %1381 = vset.pattern.permute.xlu0 7
        %1382 = vperm.xlu0 %1381, %v600
        %v1383 = vpop.permute.xlu0 %1382
        %v1385 = vlaneseq
        %v1386 = vshrl.u32 %v1385, 7
        %v1387 = vsub.s32 3, %v1386
        %v1388 = vrot.slane %v162, %v1387
        %v1389 = vmul.f32 %v1323, %v1388
        %v1390 = vmul.f32 %v1327, %v1388
        %v1391 = vmul.f32 %v1331, %v1388
        %v1392 = vmul.f32 %v1335, %v1388
        %v1393 = vmul.f32 %v1339, %v1388
        %v1394 = vmul.f32 %v1343, %v1388
        %v1395 = vmul.f32 %v1347, %v1388
        %v1396 = vmul.f32 %v1351, %v1388
        %v1397 = vmul.f32 %v1355, %v1388
        %v1398 = vmul.f32 %v1359, %v1388
        %v1399 = vmul.f32 %v1363, %v1388
        %v1400 = vmul.f32 %v1367, %v1388
        %v1401 = vmul.f32 %v1371, %v1388
        %v1402 = vmul.f32 %v1375, %v1388
        %v1403 = vmul.f32 %v1379, %v1388
        %v1404 = vmul.f32 %v1383, %v1388
        %v1405 = vadd.f32 %v1305, %v1389
        %v1406 = vadd.f32 %v1306, %v1390
        %v1407 = vadd.f32 %v1307, %v1391
        %v1408 = vadd.f32 %v1308, %v1392
        %v1409 = vadd.f32 %v1309, %v1393
        %v1410 = vadd.f32 %v1310, %v1394
        %v1411 = vadd.f32 %v1311, %v1395
        %v1412 = vadd.f32 %v1312, %v1396
        %v1413 = vadd.f32 %v1313, %v1397
        %v1414 = vadd.f32 %v1314, %v1398
        %v1415 = vadd.f32 %v1315, %v1399
        %v1416 = vadd.f32 %v1316, %v1400
        %v1417 = vadd.f32 %v1317, %v1401
        %v1418 = vadd.f32 %v1318, %v1402
        %v1419 = vadd.f32 %v1319, %v1403
        %v1420 = vadd.f32 %v1320, %v1404
        %v1421 = vmax.f32 %v1405, 0.0
        %v1422 = vmax.f32 %v1406, 0.0
        %v1423 = vmax.f32 %v1407, 0.0
        %v1424 = vmax.f32 %v1408, 0.0
        %v1425 = vmax.f32 %v1409, 0.0
        %v1426 = vmax.f32 %v1410, 0.0
        %v1427 = vmax.f32 %v1411, 0.0
        %v1428 = vmax.f32 %v1412, 0.0
        %v1429 = vmax.f32 %v1413, 0.0
        %v1430 = vmax.f32 %v1414, 0.0
        %v1431 = vmax.f32 %v1415, 0.0
        %v1432 = vmax.f32 %v1416, 0.0
        %v1433 = vmax.f32 %v1417, 0.0
        %v1434 = vmax.f32 %v1418, 0.0
        %v1435 = vmax.f32 %v1419, 0.0
        %v1436 = vmax.f32 %v1420, 0.0
        %v1437 = vlaneseq
        %v1438 = vshrl.u32 %v1437, 7
        %v1439 = vsub.s32 6, %v1438
        %v1440 = vrot.slane %v164, %v1439
        %1442 = vset.pattern.permute.xlu0 0
        %1443 = vperm.xlu0 %1442, %v1421
        %v1444 = vpop.permute.xlu0 %1443
        %1447 = vset.pattern.permute.xlu0 0
        %1448 = vperm.xlu0 %1447, %v1422
        %v1449 = vpop.permute.xlu0 %1448
        %1452 = vset.pattern.permute.xlu0 0
        %1453 = vperm.xlu0 %1452, %v1423
        %v1454 = vpop.permute.xlu0 %1453
        %1457 = vset.pattern.permute.xlu0 0
        %1458 = vperm.xlu0 %1457, %v1424
        %v1459 = vpop.permute.xlu0 %1458
        %1462 = vset.pattern.permute.xlu0 0
        %1463 = vperm.xlu0 %1462, %v1425
        %v1464 = vpop.permute.xlu0 %1463
        %1467 = vset.pattern.permute.xlu0 0
        %1468 = vperm.xlu0 %1467, %v1426
        %v1469 = vpop.permute.xlu0 %1468
        %1472 = vset.pattern.permute.xlu0 0
        %1473 = vperm.xlu0 %1472, %v1427
        %v1474 = vpop.permute.xlu0 %1473
        %1477 = vset.pattern.permute.xlu0 0
        %1478 = vperm.xlu0 %1477, %v1428
        %v1479 = vpop.permute.xlu0 %1478
        %1482 = vset.pattern.permute.xlu0 0
        %1483 = vperm.xlu0 %1482, %v1429
        %v1484 = vpop.permute.xlu0 %1483
        %1487 = vset.pattern.permute.xlu0 0
        %1488 = vperm.xlu0 %1487, %v1430
        %v1489 = vpop.permute.xlu0 %1488
        %1492 = vset.pattern.permute.xlu0 0
        %1493 = vperm.xlu0 %1492, %v1431
        %v1494 = vpop.permute.xlu0 %1493
        %1497 = vset.pattern.permute.xlu0 0
        %1498 = vperm.xlu0 %1497, %v1432
        %v1499 = vpop.permute.xlu0 %1498
        %1502 = vset.pattern.permute.xlu0 0
        %1503 = vperm.xlu0 %1502, %v1433
        %v1504 = vpop.permute.xlu0 %1503
        %1507 = vset.pattern.permute.xlu0 0
        %1508 = vperm.xlu0 %1507, %v1434
        %v1509 = vpop.permute.xlu0 %1508
        %1512 = vset.pattern.permute.xlu0 0
        %1513 = vperm.xlu0 %1512, %v1435
        %v1514 = vpop.permute.xlu0 %1513
        %1517 = vset.pattern.permute.xlu0 0
        %1518 = vperm.xlu0 %1517, %v1436
        %v1519 = vpop.permute.xlu0 %1518
        %v1521 = vlaneseq
        %v1522 = vshrl.u32 %v1521, 7
        %v1523 = vsub.s32 4, %v1522
        %v1524 = vrot.slane %v162, %v1523
        %v1525 = vmul.f32 %v1444, %v1524
        %v1526 = vmul.f32 %v1449, %v1524
        %v1527 = vmul.f32 %v1454, %v1524
        %v1528 = vmul.f32 %v1459, %v1524
        %v1529 = vmul.f32 %v1464, %v1524
        %v1530 = vmul.f32 %v1469, %v1524
        %v1531 = vmul.f32 %v1474, %v1524
        %v1532 = vmul.f32 %v1479, %v1524
        %v1533 = vmul.f32 %v1484, %v1524
        %v1534 = vmul.f32 %v1489, %v1524
        %v1535 = vmul.f32 %v1494, %v1524
        %v1536 = vmul.f32 %v1499, %v1524
        %v1537 = vmul.f32 %v1504, %v1524
        %v1538 = vmul.f32 %v1509, %v1524
        %v1539 = vmul.f32 %v1514, %v1524
        %v1540 = vmul.f32 %v1519, %v1524
        %v1541 = vadd.f32 %v1440, %v1525
        %v1542 = vadd.f32 %v1440, %v1526
        %v1543 = vadd.f32 %v1440, %v1527
        %v1544 = vadd.f32 %v1440, %v1528
        %v1545 = vadd.f32 %v1440, %v1529
        %v1546 = vadd.f32 %v1440, %v1530
        %v1547 = vadd.f32 %v1440, %v1531
        %v1548 = vadd.f32 %v1440, %v1532
        %v1549 = vadd.f32 %v1440, %v1533
        %v1550 = vadd.f32 %v1440, %v1534
        %v1551 = vadd.f32 %v1440, %v1535
        %v1552 = vadd.f32 %v1440, %v1536
        %v1553 = vadd.f32 %v1440, %v1537
        %v1554 = vadd.f32 %v1440, %v1538
        %v1555 = vadd.f32 %v1440, %v1539
        %v1556 = vadd.f32 %v1440, %v1540
        %1557 = vset.pattern.permute.xlu0 1
        %1558 = vperm.xlu0 %1557, %v1421
        %v1559 = vpop.permute.xlu0 %1558
        %1561 = vset.pattern.permute.xlu0 1
        %1562 = vperm.xlu0 %1561, %v1422
        %v1563 = vpop.permute.xlu0 %1562
        %1565 = vset.pattern.permute.xlu0 1
        %1566 = vperm.xlu0 %1565, %v1423
        %v1567 = vpop.permute.xlu0 %1566
        %1569 = vset.pattern.permute.xlu0 1
        %1570 = vperm.xlu0 %1569, %v1424
        %v1571 = vpop.permute.xlu0 %1570
        %1573 = vset.pattern.permute.xlu0 1
        %1574 = vperm.xlu0 %1573, %v1425
        %v1575 = vpop.permute.xlu0 %1574
        %1577 = vset.pattern.permute.xlu0 1
        %1578 = vperm.xlu0 %1577, %v1426
        %v1579 = vpop.permute.xlu0 %1578
        %1581 = vset.pattern.permute.xlu0 1
        %1582 = vperm.xlu0 %1581, %v1427
        %v1583 = vpop.permute.xlu0 %1582
        %1585 = vset.pattern.permute.xlu0 1
        %1586 = vperm.xlu0 %1585, %v1428
        %v1587 = vpop.permute.xlu0 %1586
        %1589 = vset.pattern.permute.xlu0 1
        %1590 = vperm.xlu0 %1589, %v1429
        %v1591 = vpop.permute.xlu0 %1590
        %1593 = vset.pattern.permute.xlu0 1
        %1594 = vperm.xlu0 %1593, %v1430
        %v1595 = vpop.permute.xlu0 %1594
        %1597 = vset.pattern.permute.xlu0 1
        %1598 = vperm.xlu0 %1597, %v1431
        %v1599 = vpop.permute.xlu0 %1598
        %1601 = vset.pattern.permute.xlu0 1
        %1602 = vperm.xlu0 %1601, %v1432
        %v1603 = vpop.permute.xlu0 %1602
        %1605 = vset.pattern.permute.xlu0 1
        %1606 = vperm.xlu0 %1605, %v1433
        %v1607 = vpop.permute.xlu0 %1606
        %1609 = vset.pattern.permute.xlu0 1
        %1610 = vperm.xlu0 %1609, %v1434
        %v1611 = vpop.permute.xlu0 %1610
        %1613 = vset.pattern.permute.xlu0 1
        %1614 = vperm.xlu0 %1613, %v1435
        %v1615 = vpop.permute.xlu0 %1614
        %1617 = vset.pattern.permute.xlu0 1
        %1618 = vperm.xlu0 %1617, %v1436
        %v1619 = vpop.permute.xlu0 %1618
        %v1621 = vlaneseq
        %v1622 = vshrl.u32 %v1621, 7
        %v1623 = vsub.s32 5, %v1622
        %v1624 = vrot.slane %v162, %v1623
        %v1625 = vmul.f32 %v1559, %v1624
        %v1626 = vmul.f32 %v1563, %v1624
        %v1627 = vmul.f32 %v1567, %v1624
        %v1628 = vmul.f32 %v1571, %v1624
        %v1629 = vmul.f32 %v1575, %v1624
        %v1630 = vmul.f32 %v1579, %v1624
        %v1631 = vmul.f32 %v1583, %v1624
        %v1632 = vmul.f32 %v1587, %v1624
        %v1633 = vmul.f32 %v1591, %v1624
        %v1634 = vmul.f32 %v1595, %v1624
        %v1635 = vmul.f32 %v1599, %v1624
        %v1636 = vmul.f32 %v1603, %v1624
        %v1637 = vmul.f32 %v1607, %v1624
        %v1638 = vmul.f32 %v1611, %v1624
        %v1639 = vmul.f32 %v1615, %v1624
        %v1640 = vmul.f32 %v1619, %v1624
        %v1641 = vadd.f32 %v1541, %v1625
        %v1642 = vadd.f32 %v1542, %v1626
        %v1643 = vadd.f32 %v1543, %v1627
        %v1644 = vadd.f32 %v1544, %v1628
        %v1645 = vadd.f32 %v1545, %v1629
        %v1646 = vadd.f32 %v1546, %v1630
        %v1647 = vadd.f32 %v1547, %v1631
        %v1648 = vadd.f32 %v1548, %v1632
        %v1649 = vadd.f32 %v1549, %v1633
        %v1650 = vadd.f32 %v1550, %v1634
        %v1651 = vadd.f32 %v1551, %v1635
        %v1652 = vadd.f32 %v1552, %v1636
        %v1653 = vadd.f32 %v1553, %v1637
        %v1654 = vadd.f32 %v1554, %v1638
        %v1655 = vadd.f32 %v1555, %v1639
        %v1656 = vadd.f32 %v1556, %v1640
        %1657 = vset.pattern.permute.xlu0 2
        %1658 = vperm.xlu0 %1657, %v1421
        %v1659 = vpop.permute.xlu0 %1658
        %1661 = vset.pattern.permute.xlu0 2
        %1662 = vperm.xlu0 %1661, %v1422
        %v1663 = vpop.permute.xlu0 %1662
        %1665 = vset.pattern.permute.xlu0 2
        %1666 = vperm.xlu0 %1665, %v1423
        %v1667 = vpop.permute.xlu0 %1666
        %1669 = vset.pattern.permute.xlu0 2
        %1670 = vperm.xlu0 %1669, %v1424
        %v1671 = vpop.permute.xlu0 %1670
        %1673 = vset.pattern.permute.xlu0 2
        %1674 = vperm.xlu0 %1673, %v1425
        %v1675 = vpop.permute.xlu0 %1674
        %1677 = vset.pattern.permute.xlu0 2
        %1678 = vperm.xlu0 %1677, %v1426
        %v1679 = vpop.permute.xlu0 %1678
        %1681 = vset.pattern.permute.xlu0 2
        %1682 = vperm.xlu0 %1681, %v1427
        %v1683 = vpop.permute.xlu0 %1682
        %1685 = vset.pattern.permute.xlu0 2
        %1686 = vperm.xlu0 %1685, %v1428
        %v1687 = vpop.permute.xlu0 %1686
        %1689 = vset.pattern.permute.xlu0 2
        %1690 = vperm.xlu0 %1689, %v1429
        %v1691 = vpop.permute.xlu0 %1690
        %1693 = vset.pattern.permute.xlu0 2
        %1694 = vperm.xlu0 %1693, %v1430
        %v1695 = vpop.permute.xlu0 %1694
        %1697 = vset.pattern.permute.xlu0 2
        %1698 = vperm.xlu0 %1697, %v1431
        %v1699 = vpop.permute.xlu0 %1698
        %1701 = vset.pattern.permute.xlu0 2
        %1702 = vperm.xlu0 %1701, %v1432
        %v1703 = vpop.permute.xlu0 %1702
        %1705 = vset.pattern.permute.xlu0 2
        %1706 = vperm.xlu0 %1705, %v1433
        %v1707 = vpop.permute.xlu0 %1706
        %1709 = vset.pattern.permute.xlu0 2
        %1710 = vperm.xlu0 %1709, %v1434
        %v1711 = vpop.permute.xlu0 %1710
        %1713 = vset.pattern.permute.xlu0 2
        %1714 = vperm.xlu0 %1713, %v1435
        %v1715 = vpop.permute.xlu0 %1714
        %1717 = vset.pattern.permute.xlu0 2
        %1718 = vperm.xlu0 %1717, %v1436
        %v1719 = vpop.permute.xlu0 %1718
        %v1721 = vlaneseq
        %v1722 = vshrl.u32 %v1721, 7
        %v1723 = vsub.s32 6, %v1722
        %v1724 = vrot.slane %v162, %v1723
        %v1725 = vmul.f32 %v1659, %v1724
        %v1726 = vmul.f32 %v1663, %v1724
        %v1727 = vmul.f32 %v1667, %v1724
        %v1728 = vmul.f32 %v1671, %v1724
        %v1729 = vmul.f32 %v1675, %v1724
        %v1730 = vmul.f32 %v1679, %v1724
        %v1731 = vmul.f32 %v1683, %v1724
        %v1732 = vmul.f32 %v1687, %v1724
        %v1733 = vmul.f32 %v1691, %v1724
        %v1734 = vmul.f32 %v1695, %v1724
        %v1735 = vmul.f32 %v1699, %v1724
        %v1736 = vmul.f32 %v1703, %v1724
        %v1737 = vmul.f32 %v1707, %v1724
        %v1738 = vmul.f32 %v1711, %v1724
        %v1739 = vmul.f32 %v1715, %v1724
        %v1740 = vmul.f32 %v1719, %v1724
        %v1741 = vadd.f32 %v1641, %v1725
        %v1742 = vadd.f32 %v1642, %v1726
        %v1743 = vadd.f32 %v1643, %v1727
        %v1744 = vadd.f32 %v1644, %v1728
        %v1745 = vadd.f32 %v1645, %v1729
        %v1746 = vadd.f32 %v1646, %v1730
        %v1747 = vadd.f32 %v1647, %v1731
        %v1748 = vadd.f32 %v1648, %v1732
        %v1749 = vadd.f32 %v1649, %v1733
        %v1750 = vadd.f32 %v1650, %v1734
        %v1751 = vadd.f32 %v1651, %v1735
        %v1752 = vadd.f32 %v1652, %v1736
        %v1753 = vadd.f32 %v1653, %v1737
        %v1754 = vadd.f32 %v1654, %v1738
        %v1755 = vadd.f32 %v1655, %v1739
        %v1756 = vadd.f32 %v1656, %v1740
        %1757 = vset.pattern.permute.xlu0 3
        %1758 = vperm.xlu0 %1757, %v1421
        %v1759 = vpop.permute.xlu0 %1758
        %1761 = vset.pattern.permute.xlu0 3
        %1762 = vperm.xlu0 %1761, %v1422
        %v1763 = vpop.permute.xlu0 %1762
        %1765 = vset.pattern.permute.xlu0 3
        %1766 = vperm.xlu0 %1765, %v1423
        %v1767 = vpop.permute.xlu0 %1766
        %1769 = vset.pattern.permute.xlu0 3
        %1770 = vperm.xlu0 %1769, %v1424
        %v1771 = vpop.permute.xlu0 %1770
        %1773 = vset.pattern.permute.xlu0 3
        %1774 = vperm.xlu0 %1773, %v1425
        %v1775 = vpop.permute.xlu0 %1774
        %1777 = vset.pattern.permute.xlu0 3
        %1778 = vperm.xlu0 %1777, %v1426
        %v1779 = vpop.permute.xlu0 %1778
        %1781 = vset.pattern.permute.xlu0 3
        %1782 = vperm.xlu0 %1781, %v1427
        %v1783 = vpop.permute.xlu0 %1782
        %1785 = vset.pattern.permute.xlu0 3
        %1786 = vperm.xlu0 %1785, %v1428
        %v1787 = vpop.permute.xlu0 %1786
        %1789 = vset.pattern.permute.xlu0 3
        %1790 = vperm.xlu0 %1789, %v1429
        %v1791 = vpop.permute.xlu0 %1790
        %1793 = vset.pattern.permute.xlu0 3
        %1794 = vperm.xlu0 %1793, %v1430
        %v1795 = vpop.permute.xlu0 %1794
        %1797 = vset.pattern.permute.xlu0 3
        %1798 = vperm.xlu0 %1797, %v1431
        %v1799 = vpop.permute.xlu0 %1798
        %1801 = vset.pattern.permute.xlu0 3
        %1802 = vperm.xlu0 %1801, %v1432
        %v1803 = vpop.permute.xlu0 %1802
        %1805 = vset.pattern.permute.xlu0 3
        %1806 = vperm.xlu0 %1805, %v1433
        %v1807 = vpop.permute.xlu0 %1806
        %1809 = vset.pattern.permute.xlu0 3
        %1810 = vperm.xlu0 %1809, %v1434
        %v1811 = vpop.permute.xlu0 %1810
        %1813 = vset.pattern.permute.xlu0 3
        %1814 = vperm.xlu0 %1813, %v1435
        %v1815 = vpop.permute.xlu0 %1814
        %1817 = vset.pattern.permute.xlu0 3
        %1818 = vperm.xlu0 %1817, %v1436
        %v1819 = vpop.permute.xlu0 %1818
        %v1821 = vlaneseq
        %v1822 = vshrl.u32 %v1821, 7
        %v1823 = vsub.s32 7, %v1822
        %v1824 = vrot.slane %v162, %v1823
        %v1825 = vmul.f32 %v1759, %v1824
        %v1826 = vmul.f32 %v1763, %v1824
        %v1827 = vmul.f32 %v1767, %v1824
        %v1828 = vmul.f32 %v1771, %v1824
        %v1829 = vmul.f32 %v1775, %v1824
        %v1830 = vmul.f32 %v1779, %v1824
        %v1831 = vmul.f32 %v1783, %v1824
        %v1832 = vmul.f32 %v1787, %v1824
        %v1833 = vmul.f32 %v1791, %v1824
        %v1834 = vmul.f32 %v1795, %v1824
        %v1835 = vmul.f32 %v1799, %v1824
        %v1836 = vmul.f32 %v1803, %v1824
        %v1837 = vmul.f32 %v1807, %v1824
        %v1838 = vmul.f32 %v1811, %v1824
        %v1839 = vmul.f32 %v1815, %v1824
        %v1840 = vmul.f32 %v1819, %v1824
        %v1841 = vadd.f32 %v1741, %v1825
        %v1842 = vadd.f32 %v1742, %v1826
        %v1843 = vadd.f32 %v1743, %v1827
        %v1844 = vadd.f32 %v1744, %v1828
        %v1845 = vadd.f32 %v1745, %v1829
        %v1846 = vadd.f32 %v1746, %v1830
        %v1847 = vadd.f32 %v1747, %v1831
        %v1848 = vadd.f32 %v1748, %v1832
        %v1849 = vadd.f32 %v1749, %v1833
        %v1850 = vadd.f32 %v1750, %v1834
        %v1851 = vadd.f32 %v1751, %v1835
        %v1852 = vadd.f32 %v1752, %v1836
        %v1853 = vadd.f32 %v1753, %v1837
        %v1854 = vadd.f32 %v1754, %v1838
        %v1855 = vadd.f32 %v1755, %v1839
        %v1856 = vadd.f32 %v1756, %v1840
        %1857 = vset.pattern.permute.xlu0 4
        %1858 = vperm.xlu0 %1857, %v1421
        %v1859 = vpop.permute.xlu0 %1858
        %1861 = vset.pattern.permute.xlu0 4
        %1862 = vperm.xlu0 %1861, %v1422
        %v1863 = vpop.permute.xlu0 %1862
        %1865 = vset.pattern.permute.xlu0 4
        %1866 = vperm.xlu0 %1865, %v1423
        %v1867 = vpop.permute.xlu0 %1866
        %1869 = vset.pattern.permute.xlu0 4
        %1870 = vperm.xlu0 %1869, %v1424
        %v1871 = vpop.permute.xlu0 %1870
        %1873 = vset.pattern.permute.xlu0 4
        %1874 = vperm.xlu0 %1873, %v1425
        %v1875 = vpop.permute.xlu0 %1874
        %1877 = vset.pattern.permute.xlu0 4
        %1878 = vperm.xlu0 %1877, %v1426
        %v1879 = vpop.permute.xlu0 %1878
        %1881 = vset.pattern.permute.xlu0 4
        %1882 = vperm.xlu0 %1881, %v1427
        %v1883 = vpop.permute.xlu0 %1882
        %1885 = vset.pattern.permute.xlu0 4
        %1886 = vperm.xlu0 %1885, %v1428
        %v1887 = vpop.permute.xlu0 %1886
        %1889 = vset.pattern.permute.xlu0 4
        %1890 = vperm.xlu0 %1889, %v1429
        %v1891 = vpop.permute.xlu0 %1890
        %1893 = vset.pattern.permute.xlu0 4
        %1894 = vperm.xlu0 %1893, %v1430
        %v1895 = vpop.permute.xlu0 %1894
        %1897 = vset.pattern.permute.xlu0 4
        %1898 = vperm.xlu0 %1897, %v1431
        %v1899 = vpop.permute.xlu0 %1898
        %1901 = vset.pattern.permute.xlu0 4
        %1902 = vperm.xlu0 %1901, %v1432
        %v1903 = vpop.permute.xlu0 %1902
        %1905 = vset.pattern.permute.xlu0 4
        %1906 = vperm.xlu0 %1905, %v1433
        %v1907 = vpop.permute.xlu0 %1906
        %1909 = vset.pattern.permute.xlu0 4
        %1910 = vperm.xlu0 %1909, %v1434
        %v1911 = vpop.permute.xlu0 %1910
        %1913 = vset.pattern.permute.xlu0 4
        %1914 = vperm.xlu0 %1913, %v1435
        %v1915 = vpop.permute.xlu0 %1914
        %1917 = vset.pattern.permute.xlu0 4
        %1918 = vperm.xlu0 %1917, %v1436
        %v1919 = vpop.permute.xlu0 %1918
        %v1921 = vlaneseq
        %v1922 = vshrl.u32 %v1921, 7
        %v1923 = vsub.s32 0, %v1922
        %v1924 = vrot.slane %v163, %v1923
        %v1925 = vmul.f32 %v1859, %v1924
        %v1926 = vmul.f32 %v1863, %v1924
        %v1927 = vmul.f32 %v1867, %v1924
        %v1928 = vmul.f32 %v1871, %v1924
        %v1929 = vmul.f32 %v1875, %v1924
        %v1930 = vmul.f32 %v1879, %v1924
        %v1931 = vmul.f32 %v1883, %v1924
        %v1932 = vmul.f32 %v1887, %v1924
        %v1933 = vmul.f32 %v1891, %v1924
        %v1934 = vmul.f32 %v1895, %v1924
        %v1935 = vmul.f32 %v1899, %v1924
        %v1936 = vmul.f32 %v1903, %v1924
        %v1937 = vmul.f32 %v1907, %v1924
        %v1938 = vmul.f32 %v1911, %v1924
        %v1939 = vmul.f32 %v1915, %v1924
        %v1940 = vmul.f32 %v1919, %v1924
        %v1941 = vadd.f32 %v1841, %v1925
        %v1942 = vadd.f32 %v1842, %v1926
        %v1943 = vadd.f32 %v1843, %v1927
        %v1944 = vadd.f32 %v1844, %v1928
        %v1945 = vadd.f32 %v1845, %v1929
        %v1946 = vadd.f32 %v1846, %v1930
        %v1947 = vadd.f32 %v1847, %v1931
        %v1948 = vadd.f32 %v1848, %v1932
        %v1949 = vadd.f32 %v1849, %v1933
        %v1950 = vadd.f32 %v1850, %v1934
        %v1951 = vadd.f32 %v1851, %v1935
        %v1952 = vadd.f32 %v1852, %v1936
        %v1953 = vadd.f32 %v1853, %v1937
        %v1954 = vadd.f32 %v1854, %v1938
        %v1955 = vadd.f32 %v1855, %v1939
        %v1956 = vadd.f32 %v1856, %v1940
        %1957 = vset.pattern.permute.xlu0 5
        %1958 = vperm.xlu0 %1957, %v1421
        %v1959 = vpop.permute.xlu0 %1958
        %1961 = vset.pattern.permute.xlu0 5
        %1962 = vperm.xlu0 %1961, %v1422
        %v1963 = vpop.permute.xlu0 %1962
        %1965 = vset.pattern.permute.xlu0 5
        %1966 = vperm.xlu0 %1965, %v1423
        %v1967 = vpop.permute.xlu0 %1966
        %1969 = vset.pattern.permute.xlu0 5
        %1970 = vperm.xlu0 %1969, %v1424
        %v1971 = vpop.permute.xlu0 %1970
        %1973 = vset.pattern.permute.xlu0 5
        %1974 = vperm.xlu0 %1973, %v1425
        %v1975 = vpop.permute.xlu0 %1974
        %1977 = vset.pattern.permute.xlu0 5
        %1978 = vperm.xlu0 %1977, %v1426
        %v1979 = vpop.permute.xlu0 %1978
        %1981 = vset.pattern.permute.xlu0 5
        %1982 = vperm.xlu0 %1981, %v1427
        %v1983 = vpop.permute.xlu0 %1982
        %1985 = vset.pattern.permute.xlu0 5
        %1986 = vperm.xlu0 %1985, %v1428
        %v1987 = vpop.permute.xlu0 %1986
        %1989 = vset.pattern.permute.xlu0 5
        %1990 = vperm.xlu0 %1989, %v1429
        %v1991 = vpop.permute.xlu0 %1990
        %1993 = vset.pattern.permute.xlu0 5
        %1994 = vperm.xlu0 %1993, %v1430
        %v1995 = vpop.permute.xlu0 %1994
        %1997 = vset.pattern.permute.xlu0 5
        %1998 = vperm.xlu0 %1997, %v1431
        %v1999 = vpop.permute.xlu0 %1998
        %2001 = vset.pattern.permute.xlu0 5
        %2002 = vperm.xlu0 %2001, %v1432
        %v2003 = vpop.permute.xlu0 %2002
        %2005 = vset.pattern.permute.xlu0 5
        %2006 = vperm.xlu0 %2005, %v1433
        %v2007 = vpop.permute.xlu0 %2006
        %2009 = vset.pattern.permute.xlu0 5
        %2010 = vperm.xlu0 %2009, %v1434
        %v2011 = vpop.permute.xlu0 %2010
        %2013 = vset.pattern.permute.xlu0 5
        %2014 = vperm.xlu0 %2013, %v1435
        %v2015 = vpop.permute.xlu0 %2014
        %2017 = vset.pattern.permute.xlu0 5
        %2018 = vperm.xlu0 %2017, %v1436
        %v2019 = vpop.permute.xlu0 %2018
        %v2021 = vlaneseq
        %v2022 = vshrl.u32 %v2021, 7
        %v2023 = vsub.s32 1, %v2022
        %v2024 = vrot.slane %v163, %v2023
        %v2025 = vmul.f32 %v1959, %v2024
        %v2026 = vmul.f32 %v1963, %v2024
        %v2027 = vmul.f32 %v1967, %v2024
        %v2028 = vmul.f32 %v1971, %v2024
        %v2029 = vmul.f32 %v1975, %v2024
        %v2030 = vmul.f32 %v1979, %v2024
        %v2031 = vmul.f32 %v1983, %v2024
        %v2032 = vmul.f32 %v1987, %v2024
        %v2033 = vmul.f32 %v1991, %v2024
        %v2034 = vmul.f32 %v1995, %v2024
        %v2035 = vmul.f32 %v1999, %v2024
        %v2036 = vmul.f32 %v2003, %v2024
        %v2037 = vmul.f32 %v2007, %v2024
        %v2038 = vmul.f32 %v2011, %v2024
        %v2039 = vmul.f32 %v2015, %v2024
        %v2040 = vmul.f32 %v2019, %v2024
        %v2041 = vadd.f32 %v1941, %v2025
        %v2042 = vadd.f32 %v1942, %v2026
        %v2043 = vadd.f32 %v1943, %v2027
        %v2044 = vadd.f32 %v1944, %v2028
        %v2045 = vadd.f32 %v1945, %v2029
        %v2046 = vadd.f32 %v1946, %v2030
        %v2047 = vadd.f32 %v1947, %v2031
        %v2048 = vadd.f32 %v1948, %v2032
        %v2049 = vadd.f32 %v1949, %v2033
        %v2050 = vadd.f32 %v1950, %v2034
        %v2051 = vadd.f32 %v1951, %v2035
        %v2052 = vadd.f32 %v1952, %v2036
        %v2053 = vadd.f32 %v1953, %v2037
        %v2054 = vadd.f32 %v1954, %v2038
        %v2055 = vadd.f32 %v1955, %v2039
        %v2056 = vadd.f32 %v1956, %v2040
        %2057 = vset.pattern.permute.xlu0 6
        %2058 = vperm.xlu0 %2057, %v1421
        %v2059 = vpop.permute.xlu0 %2058
        %2061 = vset.pattern.permute.xlu0 6
        %2062 = vperm.xlu0 %2061, %v1422
        %v2063 = vpop.permute.xlu0 %2062
        %2065 = vset.pattern.permute.xlu0 6
        %2066 = vperm.xlu0 %2065, %v1423
        %v2067 = vpop.permute.xlu0 %2066
        %2069 = vset.pattern.permute.xlu0 6
        %2070 = vperm.xlu0 %2069, %v1424
        %v2071 = vpop.permute.xlu0 %2070
        %2073 = vset.pattern.permute.xlu0 6
        %2074 = vperm.xlu0 %2073, %v1425
        %v2075 = vpop.permute.xlu0 %2074
        %2077 = vset.pattern.permute.xlu0 6
        %2078 = vperm.xlu0 %2077, %v1426
        %v2079 = vpop.permute.xlu0 %2078
        %2081 = vset.pattern.permute.xlu0 6
        %2082 = vperm.xlu0 %2081, %v1427
        %v2083 = vpop.permute.xlu0 %2082
        %2085 = vset.pattern.permute.xlu0 6
        %2086 = vperm.xlu0 %2085, %v1428
        %v2087 = vpop.permute.xlu0 %2086
        %2089 = vset.pattern.permute.xlu0 6
        %2090 = vperm.xlu0 %2089, %v1429
        %v2091 = vpop.permute.xlu0 %2090
        %2093 = vset.pattern.permute.xlu0 6
        %2094 = vperm.xlu0 %2093, %v1430
        %v2095 = vpop.permute.xlu0 %2094
        %2097 = vset.pattern.permute.xlu0 6
        %2098 = vperm.xlu0 %2097, %v1431
        %v2099 = vpop.permute.xlu0 %2098
        %2101 = vset.pattern.permute.xlu0 6
        %2102 = vperm.xlu0 %2101, %v1432
        %v2103 = vpop.permute.xlu0 %2102
        %2105 = vset.pattern.permute.xlu0 6
        %2106 = vperm.xlu0 %2105, %v1433
        %v2107 = vpop.permute.xlu0 %2106
        %2109 = vset.pattern.permute.xlu0 6
        %2110 = vperm.xlu0 %2109, %v1434
        %v2111 = vpop.permute.xlu0 %2110
        %2113 = vset.pattern.permute.xlu0 6
        %2114 = vperm.xlu0 %2113, %v1435
        %v2115 = vpop.permute.xlu0 %2114
        %2117 = vset.pattern.permute.xlu0 6
        %2118 = vperm.xlu0 %2117, %v1436
        %v2119 = vpop.permute.xlu0 %2118
        %v2121 = vlaneseq
        %v2122 = vshrl.u32 %v2121, 7
        %v2123 = vsub.s32 2, %v2122
        %v2124 = vrot.slane %v163, %v2123
        %v2125 = vmul.f32 %v2059, %v2124
        %v2126 = vmul.f32 %v2063, %v2124
        %v2127 = vmul.f32 %v2067, %v2124
        %v2128 = vmul.f32 %v2071, %v2124
        %v2129 = vmul.f32 %v2075, %v2124
        %v2130 = vmul.f32 %v2079, %v2124
        %v2131 = vmul.f32 %v2083, %v2124
        %v2132 = vmul.f32 %v2087, %v2124
        %v2133 = vmul.f32 %v2091, %v2124
        %v2134 = vmul.f32 %v2095, %v2124
        %v2135 = vmul.f32 %v2099, %v2124
        %v2136 = vmul.f32 %v2103, %v2124
        %v2137 = vmul.f32 %v2107, %v2124
        %v2138 = vmul.f32 %v2111, %v2124
        %v2139 = vmul.f32 %v2115, %v2124
        %v2140 = vmul.f32 %v2119, %v2124
        %v2141 = vadd.f32 %v2041, %v2125
        %v2142 = vadd.f32 %v2042, %v2126
        %v2143 = vadd.f32 %v2043, %v2127
        %v2144 = vadd.f32 %v2044, %v2128
        %v2145 = vadd.f32 %v2045, %v2129
        %v2146 = vadd.f32 %v2046, %v2130
        %v2147 = vadd.f32 %v2047, %v2131
        %v2148 = vadd.f32 %v2048, %v2132
        %v2149 = vadd.f32 %v2049, %v2133
        %v2150 = vadd.f32 %v2050, %v2134
        %v2151 = vadd.f32 %v2051, %v2135
        %v2152 = vadd.f32 %v2052, %v2136
        %v2153 = vadd.f32 %v2053, %v2137
        %v2154 = vadd.f32 %v2054, %v2138
        %v2155 = vadd.f32 %v2055, %v2139
        %v2156 = vadd.f32 %v2056, %v2140
        %2157 = vset.pattern.permute.xlu0 7
        %2158 = vperm.xlu0 %2157, %v1421
        %v2159 = vpop.permute.xlu0 %2158
        %2161 = vset.pattern.permute.xlu0 7
        %2162 = vperm.xlu0 %2161, %v1422
        %v2163 = vpop.permute.xlu0 %2162
        %2165 = vset.pattern.permute.xlu0 7
        %2166 = vperm.xlu0 %2165, %v1423
        %v2167 = vpop.permute.xlu0 %2166
        %2169 = vset.pattern.permute.xlu0 7
        %2170 = vperm.xlu0 %2169, %v1424
        %v2171 = vpop.permute.xlu0 %2170
        %2173 = vset.pattern.permute.xlu0 7
        %2174 = vperm.xlu0 %2173, %v1425
        %v2175 = vpop.permute.xlu0 %2174
        %2177 = vset.pattern.permute.xlu0 7
        %2178 = vperm.xlu0 %2177, %v1426
        %v2179 = vpop.permute.xlu0 %2178
        %2181 = vset.pattern.permute.xlu0 7
        %2182 = vperm.xlu0 %2181, %v1427
        %v2183 = vpop.permute.xlu0 %2182
        %2185 = vset.pattern.permute.xlu0 7
        %2186 = vperm.xlu0 %2185, %v1428
        %v2187 = vpop.permute.xlu0 %2186
        %2189 = vset.pattern.permute.xlu0 7
        %2190 = vperm.xlu0 %2189, %v1429
        %v2191 = vpop.permute.xlu0 %2190
        %2193 = vset.pattern.permute.xlu0 7
        %2194 = vperm.xlu0 %2193, %v1430
        %v2195 = vpop.permute.xlu0 %2194
        %2197 = vset.pattern.permute.xlu0 7
        %2198 = vperm.xlu0 %2197, %v1431
        %v2199 = vpop.permute.xlu0 %2198
        %2201 = vset.pattern.permute.xlu0 7
        %2202 = vperm.xlu0 %2201, %v1432
        %v2203 = vpop.permute.xlu0 %2202
        %2205 = vset.pattern.permute.xlu0 7
        %2206 = vperm.xlu0 %2205, %v1433
        %v2207 = vpop.permute.xlu0 %2206
        %2209 = vset.pattern.permute.xlu0 7
        %2210 = vperm.xlu0 %2209, %v1434
        %v2211 = vpop.permute.xlu0 %2210
        %2213 = vset.pattern.permute.xlu0 7
        %2214 = vperm.xlu0 %2213, %v1435
        %v2215 = vpop.permute.xlu0 %2214
        %2217 = vset.pattern.permute.xlu0 7
        %2218 = vperm.xlu0 %2217, %v1436
        %v2219 = vpop.permute.xlu0 %2218
        %v2221 = vlaneseq
        %v2222 = vshrl.u32 %v2221, 7
        %v2223 = vsub.s32 3, %v2222
        %v2224 = vrot.slane %v163, %v2223
        %v2225 = vmul.f32 %v2159, %v2224
        %v2226 = vmul.f32 %v2163, %v2224
        %v2227 = vmul.f32 %v2167, %v2224
        %v2228 = vmul.f32 %v2171, %v2224
        %v2229 = vmul.f32 %v2175, %v2224
        %v2230 = vmul.f32 %v2179, %v2224
        %v2231 = vmul.f32 %v2183, %v2224
        %v2232 = vmul.f32 %v2187, %v2224
        %v2233 = vmul.f32 %v2191, %v2224
        %v2234 = vmul.f32 %v2195, %v2224
        %v2235 = vmul.f32 %v2199, %v2224
        %v2236 = vmul.f32 %v2203, %v2224
        %v2237 = vmul.f32 %v2207, %v2224
        %v2238 = vmul.f32 %v2211, %v2224
        %v2239 = vmul.f32 %v2215, %v2224
        %v2240 = vmul.f32 %v2219, %v2224
        %v2241 = vadd.f32 %v2141, %v2225
        %v2242 = vadd.f32 %v2142, %v2226
        %v2243 = vadd.f32 %v2143, %v2227
        %v2244 = vadd.f32 %v2144, %v2228
        %v2245 = vadd.f32 %v2145, %v2229
        %v2246 = vadd.f32 %v2146, %v2230
        %v2247 = vadd.f32 %v2147, %v2231
        %v2248 = vadd.f32 %v2148, %v2232
        %v2249 = vadd.f32 %v2149, %v2233
        %v2250 = vadd.f32 %v2150, %v2234
        %v2251 = vadd.f32 %v2151, %v2235
        %v2252 = vadd.f32 %v2152, %v2236
        %v2253 = vadd.f32 %v2153, %v2237
        %v2254 = vadd.f32 %v2154, %v2238
        %v2255 = vadd.f32 %v2155, %v2239
        %v2256 = vadd.f32 %v2156, %v2240
        %v2257 = vmax.f32 %v2241, 0.0
        %v2258 = vmax.f32 %v2242, 0.0
        %v2259 = vmax.f32 %v2243, 0.0
        %v2260 = vmax.f32 %v2244, 0.0
        %v2261 = vmax.f32 %v2245, 0.0
        %v2262 = vmax.f32 %v2246, 0.0
        %v2263 = vmax.f32 %v2247, 0.0
        %v2264 = vmax.f32 %v2248, 0.0
        %v2265 = vmax.f32 %v2249, 0.0
        %v2266 = vmax.f32 %v2250, 0.0
        %v2267 = vmax.f32 %v2251, 0.0
        %v2268 = vmax.f32 %v2252, 0.0
        %v2269 = vmax.f32 %v2253, 0.0
        %v2270 = vmax.f32 %v2254, 0.0
        %v2271 = vmax.f32 %v2255, 0.0
        %v2272 = vmax.f32 %v2256, 0.0
        %v2273 = vlaneseq
        %v2274 = vshrl.u32 %v2273, 7
        %v2275 = vsub.s32 7, %v2274
        %v2276 = vrot.slane %v164, %v2275
        %2278 = vset.pattern.permute.xlu0 0
        %2279 = vperm.xlu0 %2278, %v2257
        %v2280 = vpop.permute.xlu0 %2279
        %2283 = vset.pattern.permute.xlu0 0
        %2284 = vperm.xlu0 %2283, %v2258
        %v2285 = vpop.permute.xlu0 %2284
        %2288 = vset.pattern.permute.xlu0 0
        %2289 = vperm.xlu0 %2288, %v2259
        %v2290 = vpop.permute.xlu0 %2289
        %2293 = vset.pattern.permute.xlu0 0
        %2294 = vperm.xlu0 %2293, %v2260
        %v2295 = vpop.permute.xlu0 %2294
        %2298 = vset.pattern.permute.xlu0 0
        %2299 = vperm.xlu0 %2298, %v2261
        %v2300 = vpop.permute.xlu0 %2299
        %2303 = vset.pattern.permute.xlu0 0
        %2304 = vperm.xlu0 %2303, %v2262
        %v2305 = vpop.permute.xlu0 %2304
        %2308 = vset.pattern.permute.xlu0 0
        %2309 = vperm.xlu0 %2308, %v2263
        %v2310 = vpop.permute.xlu0 %2309
        %2313 = vset.pattern.permute.xlu0 0
        %2314 = vperm.xlu0 %2313, %v2264
        %v2315 = vpop.permute.xlu0 %2314
        %2318 = vset.pattern.permute.xlu0 0
        %2319 = vperm.xlu0 %2318, %v2265
        %v2320 = vpop.permute.xlu0 %2319
        %2323 = vset.pattern.permute.xlu0 0
        %2324 = vperm.xlu0 %2323, %v2266
        %v2325 = vpop.permute.xlu0 %2324
        %2328 = vset.pattern.permute.xlu0 0
        %2329 = vperm.xlu0 %2328, %v2267
        %v2330 = vpop.permute.xlu0 %2329
        %2333 = vset.pattern.permute.xlu0 0
        %2334 = vperm.xlu0 %2333, %v2268
        %v2335 = vpop.permute.xlu0 %2334
        %2338 = vset.pattern.permute.xlu0 0
        %2339 = vperm.xlu0 %2338, %v2269
        %v2340 = vpop.permute.xlu0 %2339
        %2343 = vset.pattern.permute.xlu0 0
        %2344 = vperm.xlu0 %2343, %v2270
        %v2345 = vpop.permute.xlu0 %2344
        %2348 = vset.pattern.permute.xlu0 0
        %2349 = vperm.xlu0 %2348, %v2271
        %v2350 = vpop.permute.xlu0 %2349
        %2353 = vset.pattern.permute.xlu0 0
        %2354 = vperm.xlu0 %2353, %v2272
        %v2355 = vpop.permute.xlu0 %2354
        %v2357 = vlaneseq
        %v2358 = vshrl.u32 %v2357, 7
        %v2359 = vsub.s32 4, %v2358
        %v2360 = vrot.slane %v163, %v2359
        %v2361 = vmul.f32 %v2280, %v2360
        %v2362 = vmul.f32 %v2285, %v2360
        %v2363 = vmul.f32 %v2290, %v2360
        %v2364 = vmul.f32 %v2295, %v2360
        %v2365 = vmul.f32 %v2300, %v2360
        %v2366 = vmul.f32 %v2305, %v2360
        %v2367 = vmul.f32 %v2310, %v2360
        %v2368 = vmul.f32 %v2315, %v2360
        %v2369 = vmul.f32 %v2320, %v2360
        %v2370 = vmul.f32 %v2325, %v2360
        %v2371 = vmul.f32 %v2330, %v2360
        %v2372 = vmul.f32 %v2335, %v2360
        %v2373 = vmul.f32 %v2340, %v2360
        %v2374 = vmul.f32 %v2345, %v2360
        %v2375 = vmul.f32 %v2350, %v2360
        %v2376 = vmul.f32 %v2355, %v2360
        %v2377 = vadd.f32 %v2276, %v2361
        %v2378 = vadd.f32 %v2276, %v2362
        %v2379 = vadd.f32 %v2276, %v2363
        %v2380 = vadd.f32 %v2276, %v2364
        %v2381 = vadd.f32 %v2276, %v2365
        %v2382 = vadd.f32 %v2276, %v2366
        %v2383 = vadd.f32 %v2276, %v2367
        %v2384 = vadd.f32 %v2276, %v2368
        %v2385 = vadd.f32 %v2276, %v2369
        %v2386 = vadd.f32 %v2276, %v2370
        %v2387 = vadd.f32 %v2276, %v2371
        %v2388 = vadd.f32 %v2276, %v2372
        %v2389 = vadd.f32 %v2276, %v2373
        %v2390 = vadd.f32 %v2276, %v2374
        %v2391 = vadd.f32 %v2276, %v2375
        %v2392 = vadd.f32 %v2276, %v2376
        %2393 = vset.pattern.permute.xlu0 1
        %2394 = vperm.xlu0 %2393, %v2257
        %v2395 = vpop.permute.xlu0 %2394
        %2397 = vset.pattern.permute.xlu0 1
        %2398 = vperm.xlu0 %2397, %v2258
        %v2399 = vpop.permute.xlu0 %2398
        %2401 = vset.pattern.permute.xlu0 1
        %2402 = vperm.xlu0 %2401, %v2259
        %v2403 = vpop.permute.xlu0 %2402
        %2405 = vset.pattern.permute.xlu0 1
        %2406 = vperm.xlu0 %2405, %v2260
        %v2407 = vpop.permute.xlu0 %2406
        %2409 = vset.pattern.permute.xlu0 1
        %2410 = vperm.xlu0 %2409, %v2261
        %v2411 = vpop.permute.xlu0 %2410
        %2413 = vset.pattern.permute.xlu0 1
        %2414 = vperm.xlu0 %2413, %v2262
        %v2415 = vpop.permute.xlu0 %2414
        %2417 = vset.pattern.permute.xlu0 1
        %2418 = vperm.xlu0 %2417, %v2263
        %v2419 = vpop.permute.xlu0 %2418
        %2421 = vset.pattern.permute.xlu0 1
        %2422 = vperm.xlu0 %2421, %v2264
        %v2423 = vpop.permute.xlu0 %2422
        %2425 = vset.pattern.permute.xlu0 1
        %2426 = vperm.xlu0 %2425, %v2265
        %v2427 = vpop.permute.xlu0 %2426
        %2429 = vset.pattern.permute.xlu0 1
        %2430 = vperm.xlu0 %2429, %v2266
        %v2431 = vpop.permute.xlu0 %2430
        %2433 = vset.pattern.permute.xlu0 1
        %2434 = vperm.xlu0 %2433, %v2267
        %v2435 = vpop.permute.xlu0 %2434
        %2437 = vset.pattern.permute.xlu0 1
        %2438 = vperm.xlu0 %2437, %v2268
        %v2439 = vpop.permute.xlu0 %2438
        %2441 = vset.pattern.permute.xlu0 1
        %2442 = vperm.xlu0 %2441, %v2269
        %v2443 = vpop.permute.xlu0 %2442
        %2445 = vset.pattern.permute.xlu0 1
        %2446 = vperm.xlu0 %2445, %v2270
        %v2447 = vpop.permute.xlu0 %2446
        %2449 = vset.pattern.permute.xlu0 1
        %2450 = vperm.xlu0 %2449, %v2271
        %v2451 = vpop.permute.xlu0 %2450
        %2453 = vset.pattern.permute.xlu0 1
        %2454 = vperm.xlu0 %2453, %v2272
        %v2455 = vpop.permute.xlu0 %2454
        %v2457 = vlaneseq
        %v2458 = vshrl.u32 %v2457, 7
        %v2459 = vsub.s32 5, %v2458
        %v2460 = vrot.slane %v163, %v2459
        %v2461 = vmul.f32 %v2395, %v2460
        %v2462 = vmul.f32 %v2399, %v2460
        %v2463 = vmul.f32 %v2403, %v2460
        %v2464 = vmul.f32 %v2407, %v2460
        %v2465 = vmul.f32 %v2411, %v2460
        %v2466 = vmul.f32 %v2415, %v2460
        %v2467 = vmul.f32 %v2419, %v2460
        %v2468 = vmul.f32 %v2423, %v2460
        %v2469 = vmul.f32 %v2427, %v2460
        %v2470 = vmul.f32 %v2431, %v2460
        %v2471 = vmul.f32 %v2435, %v2460
        %v2472 = vmul.f32 %v2439, %v2460
        %v2473 = vmul.f32 %v2443, %v2460
        %v2474 = vmul.f32 %v2447, %v2460
        %v2475 = vmul.f32 %v2451, %v2460
        %v2476 = vmul.f32 %v2455, %v2460
        %v2477 = vadd.f32 %v2377, %v2461
        %v2478 = vadd.f32 %v2378, %v2462
        %v2479 = vadd.f32 %v2379, %v2463
        %v2480 = vadd.f32 %v2380, %v2464
        %v2481 = vadd.f32 %v2381, %v2465
        %v2482 = vadd.f32 %v2382, %v2466
        %v2483 = vadd.f32 %v2383, %v2467
        %v2484 = vadd.f32 %v2384, %v2468
        %v2485 = vadd.f32 %v2385, %v2469
        %v2486 = vadd.f32 %v2386, %v2470
        %v2487 = vadd.f32 %v2387, %v2471
        %v2488 = vadd.f32 %v2388, %v2472
        %v2489 = vadd.f32 %v2389, %v2473
        %v2490 = vadd.f32 %v2390, %v2474
        %v2491 = vadd.f32 %v2391, %v2475
        %v2492 = vadd.f32 %v2392, %v2476
        %2493 = vset.pattern.permute.xlu0 2
        %2494 = vperm.xlu0 %2493, %v2257
        %v2495 = vpop.permute.xlu0 %2494
        %2497 = vset.pattern.permute.xlu0 2
        %2498 = vperm.xlu0 %2497, %v2258
        %v2499 = vpop.permute.xlu0 %2498
        %2501 = vset.pattern.permute.xlu0 2
        %2502 = vperm.xlu0 %2501, %v2259
        %v2503 = vpop.permute.xlu0 %2502
        %2505 = vset.pattern.permute.xlu0 2
        %2506 = vperm.xlu0 %2505, %v2260
        %v2507 = vpop.permute.xlu0 %2506
        %2509 = vset.pattern.permute.xlu0 2
        %2510 = vperm.xlu0 %2509, %v2261
        %v2511 = vpop.permute.xlu0 %2510
        %2513 = vset.pattern.permute.xlu0 2
        %2514 = vperm.xlu0 %2513, %v2262
        %v2515 = vpop.permute.xlu0 %2514
        %2517 = vset.pattern.permute.xlu0 2
        %2518 = vperm.xlu0 %2517, %v2263
        %v2519 = vpop.permute.xlu0 %2518
        %2521 = vset.pattern.permute.xlu0 2
        %2522 = vperm.xlu0 %2521, %v2264
        %v2523 = vpop.permute.xlu0 %2522
        %2525 = vset.pattern.permute.xlu0 2
        %2526 = vperm.xlu0 %2525, %v2265
        %v2527 = vpop.permute.xlu0 %2526
        %2529 = vset.pattern.permute.xlu0 2
        %2530 = vperm.xlu0 %2529, %v2266
        %v2531 = vpop.permute.xlu0 %2530
        %2533 = vset.pattern.permute.xlu0 2
        %2534 = vperm.xlu0 %2533, %v2267
        %v2535 = vpop.permute.xlu0 %2534
        %2537 = vset.pattern.permute.xlu0 2
        %2538 = vperm.xlu0 %2537, %v2268
        %v2539 = vpop.permute.xlu0 %2538
        %2541 = vset.pattern.permute.xlu0 2
        %2542 = vperm.xlu0 %2541, %v2269
        %v2543 = vpop.permute.xlu0 %2542
        %2545 = vset.pattern.permute.xlu0 2
        %2546 = vperm.xlu0 %2545, %v2270
        %v2547 = vpop.permute.xlu0 %2546
        %2549 = vset.pattern.permute.xlu0 2
        %2550 = vperm.xlu0 %2549, %v2271
        %v2551 = vpop.permute.xlu0 %2550
        %2553 = vset.pattern.permute.xlu0 2
        %2554 = vperm.xlu0 %2553, %v2272
        %v2555 = vpop.permute.xlu0 %2554
        %v2557 = vlaneseq
        %v2558 = vshrl.u32 %v2557, 7
        %v2559 = vsub.s32 6, %v2558
        %v2560 = vrot.slane %v163, %v2559
        %v2561 = vmul.f32 %v2495, %v2560
        %v2562 = vmul.f32 %v2499, %v2560
        %v2563 = vmul.f32 %v2503, %v2560
        %v2564 = vmul.f32 %v2507, %v2560
        %v2565 = vmul.f32 %v2511, %v2560
        %v2566 = vmul.f32 %v2515, %v2560
        %v2567 = vmul.f32 %v2519, %v2560
        %v2568 = vmul.f32 %v2523, %v2560
        %v2569 = vmul.f32 %v2527, %v2560
        %v2570 = vmul.f32 %v2531, %v2560
        %v2571 = vmul.f32 %v2535, %v2560
        %v2572 = vmul.f32 %v2539, %v2560
        %v2573 = vmul.f32 %v2543, %v2560
        %v2574 = vmul.f32 %v2547, %v2560
        %v2575 = vmul.f32 %v2551, %v2560
        %v2576 = vmul.f32 %v2555, %v2560
        %v2577 = vadd.f32 %v2477, %v2561
        %v2578 = vadd.f32 %v2478, %v2562
        %v2579 = vadd.f32 %v2479, %v2563
        %v2580 = vadd.f32 %v2480, %v2564
        %v2581 = vadd.f32 %v2481, %v2565
        %v2582 = vadd.f32 %v2482, %v2566
        %v2583 = vadd.f32 %v2483, %v2567
        %v2584 = vadd.f32 %v2484, %v2568
        %v2585 = vadd.f32 %v2485, %v2569
        %v2586 = vadd.f32 %v2486, %v2570
        %v2587 = vadd.f32 %v2487, %v2571
        %v2588 = vadd.f32 %v2488, %v2572
        %v2589 = vadd.f32 %v2489, %v2573
        %v2590 = vadd.f32 %v2490, %v2574
        %v2591 = vadd.f32 %v2491, %v2575
        %v2592 = vadd.f32 %v2492, %v2576
        %2593 = vset.pattern.permute.xlu0 3
        %2594 = vperm.xlu0 %2593, %v2257
        %v2595 = vpop.permute.xlu0 %2594
        %2597 = vset.pattern.permute.xlu0 3
        %2598 = vperm.xlu0 %2597, %v2258
        %v2599 = vpop.permute.xlu0 %2598
        %2601 = vset.pattern.permute.xlu0 3
        %2602 = vperm.xlu0 %2601, %v2259
        %v2603 = vpop.permute.xlu0 %2602
        %2605 = vset.pattern.permute.xlu0 3
        %2606 = vperm.xlu0 %2605, %v2260
        %v2607 = vpop.permute.xlu0 %2606
        %2609 = vset.pattern.permute.xlu0 3
        %2610 = vperm.xlu0 %2609, %v2261
        %v2611 = vpop.permute.xlu0 %2610
        %2613 = vset.pattern.permute.xlu0 3
        %2614 = vperm.xlu0 %2613, %v2262
        %v2615 = vpop.permute.xlu0 %2614
        %2617 = vset.pattern.permute.xlu0 3
        %2618 = vperm.xlu0 %2617, %v2263
        %v2619 = vpop.permute.xlu0 %2618
        %2621 = vset.pattern.permute.xlu0 3
        %2622 = vperm.xlu0 %2621, %v2264
        %v2623 = vpop.permute.xlu0 %2622
        %2625 = vset.pattern.permute.xlu0 3
        %2626 = vperm.xlu0 %2625, %v2265
        %v2627 = vpop.permute.xlu0 %2626
        %2629 = vset.pattern.permute.xlu0 3
        %2630 = vperm.xlu0 %2629, %v2266
        %v2631 = vpop.permute.xlu0 %2630
        %2633 = vset.pattern.permute.xlu0 3
        %2634 = vperm.xlu0 %2633, %v2267
        %v2635 = vpop.permute.xlu0 %2634
        %2637 = vset.pattern.permute.xlu0 3
        %2638 = vperm.xlu0 %2637, %v2268
        %v2639 = vpop.permute.xlu0 %2638
        %2641 = vset.pattern.permute.xlu0 3
        %2642 = vperm.xlu0 %2641, %v2269
        %v2643 = vpop.permute.xlu0 %2642
        %2645 = vset.pattern.permute.xlu0 3
        %2646 = vperm.xlu0 %2645, %v2270
        %v2647 = vpop.permute.xlu0 %2646
        %2649 = vset.pattern.permute.xlu0 3
        %2650 = vperm.xlu0 %2649, %v2271
        %v2651 = vpop.permute.xlu0 %2650
        %2653 = vset.pattern.permute.xlu0 3
        %2654 = vperm.xlu0 %2653, %v2272
        %v2655 = vpop.permute.xlu0 %2654
        %v2657 = vlaneseq
        %v2658 = vshrl.u32 %v2657, 7
        %v2659 = vsub.s32 7, %v2658
        %v2660 = vrot.slane %v163, %v2659
        %v2661 = vmul.f32 %v2595, %v2660
        %v2662 = vmul.f32 %v2599, %v2660
        %v2663 = vmul.f32 %v2603, %v2660
        %v2664 = vmul.f32 %v2607, %v2660
        %v2665 = vmul.f32 %v2611, %v2660
        %v2666 = vmul.f32 %v2615, %v2660
        %v2667 = vmul.f32 %v2619, %v2660
        %v2668 = vmul.f32 %v2623, %v2660
        %v2669 = vmul.f32 %v2627, %v2660
        %v2670 = vmul.f32 %v2631, %v2660
        %v2671 = vmul.f32 %v2635, %v2660
        %v2672 = vmul.f32 %v2639, %v2660
        %v2673 = vmul.f32 %v2643, %v2660
        %v2674 = vmul.f32 %v2647, %v2660
        %v2675 = vmul.f32 %v2651, %v2660
        %v2676 = vmul.f32 %v2655, %v2660
        %v2677 = vadd.f32 %v2577, %v2661
        %v2678 = vadd.f32 %v2578, %v2662
        %v2679 = vadd.f32 %v2579, %v2663
        %v2680 = vadd.f32 %v2580, %v2664
        %v2681 = vadd.f32 %v2581, %v2665
        %v2682 = vadd.f32 %v2582, %v2666
        %v2683 = vadd.f32 %v2583, %v2667
        %v2684 = vadd.f32 %v2584, %v2668
        %v2685 = vadd.f32 %v2585, %v2669
        %v2686 = vadd.f32 %v2586, %v2670
        %v2687 = vadd.f32 %v2587, %v2671
        %v2688 = vadd.f32 %v2588, %v2672
        %v2689 = vadd.f32 %v2589, %v2673
        %v2690 = vadd.f32 %v2590, %v2674
        %v2691 = vadd.f32 %v2591, %v2675
        %v2692 = vadd.f32 %v2592, %v2676
        %2693 = vset.pattern.permute.xlu0 4
        %2694 = vperm.xlu0 %2693, %v2257
        %v2695 = vpop.permute.xlu0 %2694
        %2697 = vset.pattern.permute.xlu0 4
        %2698 = vperm.xlu0 %2697, %v2258
        %v2699 = vpop.permute.xlu0 %2698
        %2701 = vset.pattern.permute.xlu0 4
        %2702 = vperm.xlu0 %2701, %v2259
        %v2703 = vpop.permute.xlu0 %2702
        %2705 = vset.pattern.permute.xlu0 4
        %2706 = vperm.xlu0 %2705, %v2260
        %v2707 = vpop.permute.xlu0 %2706
        %2709 = vset.pattern.permute.xlu0 4
        %2710 = vperm.xlu0 %2709, %v2261
        %v2711 = vpop.permute.xlu0 %2710
        %2713 = vset.pattern.permute.xlu0 4
        %2714 = vperm.xlu0 %2713, %v2262
        %v2715 = vpop.permute.xlu0 %2714
        %2717 = vset.pattern.permute.xlu0 4
        %2718 = vperm.xlu0 %2717, %v2263
        %v2719 = vpop.permute.xlu0 %2718
        %2721 = vset.pattern.permute.xlu0 4
        %2722 = vperm.xlu0 %2721, %v2264
        %v2723 = vpop.permute.xlu0 %2722
        %2725 = vset.pattern.permute.xlu0 4
        %2726 = vperm.xlu0 %2725, %v2265
        %v2727 = vpop.permute.xlu0 %2726
        %2729 = vset.pattern.permute.xlu0 4
        %2730 = vperm.xlu0 %2729, %v2266
        %v2731 = vpop.permute.xlu0 %2730
        %2733 = vset.pattern.permute.xlu0 4
        %2734 = vperm.xlu0 %2733, %v2267
        %v2735 = vpop.permute.xlu0 %2734
        %2737 = vset.pattern.permute.xlu0 4
        %2738 = vperm.xlu0 %2737, %v2268
        %v2739 = vpop.permute.xlu0 %2738
        %2741 = vset.pattern.permute.xlu0 4
        %2742 = vperm.xlu0 %2741, %v2269
        %v2743 = vpop.permute.xlu0 %2742
        %2745 = vset.pattern.permute.xlu0 4
        %2746 = vperm.xlu0 %2745, %v2270
        %v2747 = vpop.permute.xlu0 %2746
        %2749 = vset.pattern.permute.xlu0 4
        %2750 = vperm.xlu0 %2749, %v2271
        %v2751 = vpop.permute.xlu0 %2750
        %2753 = vset.pattern.permute.xlu0 4
        %2754 = vperm.xlu0 %2753, %v2272
        %v2755 = vpop.permute.xlu0 %2754
        %v2757 = vlaneseq
        %v2758 = vshrl.u32 %v2757, 7
        %v2759 = vsub.s32 0, %v2758
        %v2760 = vrot.slane %v164, %v2759
        %v2761 = vmul.f32 %v2695, %v2760
        %v2762 = vmul.f32 %v2699, %v2760
        %v2763 = vmul.f32 %v2703, %v2760
        %v2764 = vmul.f32 %v2707, %v2760
        %v2765 = vmul.f32 %v2711, %v2760
        %v2766 = vmul.f32 %v2715, %v2760
        %v2767 = vmul.f32 %v2719, %v2760
        %v2768 = vmul.f32 %v2723, %v2760
        %v2769 = vmul.f32 %v2727, %v2760
        %v2770 = vmul.f32 %v2731, %v2760
        %v2771 = vmul.f32 %v2735, %v2760
        %v2772 = vmul.f32 %v2739, %v2760
        %v2773 = vmul.f32 %v2743, %v2760
        %v2774 = vmul.f32 %v2747, %v2760
        %v2775 = vmul.f32 %v2751, %v2760
        %v2776 = vmul.f32 %v2755, %v2760
        %v2777 = vadd.f32 %v2677, %v2761
        %v2778 = vadd.f32 %v2678, %v2762
        %v2779 = vadd.f32 %v2679, %v2763
        %v2780 = vadd.f32 %v2680, %v2764
        %v2781 = vadd.f32 %v2681, %v2765
        %v2782 = vadd.f32 %v2682, %v2766
        %v2783 = vadd.f32 %v2683, %v2767
        %v2784 = vadd.f32 %v2684, %v2768
        %v2785 = vadd.f32 %v2685, %v2769
        %v2786 = vadd.f32 %v2686, %v2770
        %v2787 = vadd.f32 %v2687, %v2771
        %v2788 = vadd.f32 %v2688, %v2772
        %v2789 = vadd.f32 %v2689, %v2773
        %v2790 = vadd.f32 %v2690, %v2774
        %v2791 = vadd.f32 %v2691, %v2775
        %v2792 = vadd.f32 %v2692, %v2776
        %2793 = vset.pattern.permute.xlu0 5
        %2794 = vperm.xlu0 %2793, %v2257
        %v2795 = vpop.permute.xlu0 %2794
        %2797 = vset.pattern.permute.xlu0 5
        %2798 = vperm.xlu0 %2797, %v2258
        %v2799 = vpop.permute.xlu0 %2798
        %2801 = vset.pattern.permute.xlu0 5
        %2802 = vperm.xlu0 %2801, %v2259
        %v2803 = vpop.permute.xlu0 %2802
        %2805 = vset.pattern.permute.xlu0 5
        %2806 = vperm.xlu0 %2805, %v2260
        %v2807 = vpop.permute.xlu0 %2806
        %2809 = vset.pattern.permute.xlu0 5
        %2810 = vperm.xlu0 %2809, %v2261
        %v2811 = vpop.permute.xlu0 %2810
        %2813 = vset.pattern.permute.xlu0 5
        %2814 = vperm.xlu0 %2813, %v2262
        %v2815 = vpop.permute.xlu0 %2814
        %2817 = vset.pattern.permute.xlu0 5
        %2818 = vperm.xlu0 %2817, %v2263
        %v2819 = vpop.permute.xlu0 %2818
        %2821 = vset.pattern.permute.xlu0 5
        %2822 = vperm.xlu0 %2821, %v2264
        %v2823 = vpop.permute.xlu0 %2822
        %2825 = vset.pattern.permute.xlu0 5
        %2826 = vperm.xlu0 %2825, %v2265
        %v2827 = vpop.permute.xlu0 %2826
        %2829 = vset.pattern.permute.xlu0 5
        %2830 = vperm.xlu0 %2829, %v2266
        %v2831 = vpop.permute.xlu0 %2830
        %2833 = vset.pattern.permute.xlu0 5
        %2834 = vperm.xlu0 %2833, %v2267
        %v2835 = vpop.permute.xlu0 %2834
        %2837 = vset.pattern.permute.xlu0 5
        %2838 = vperm.xlu0 %2837, %v2268
        %v2839 = vpop.permute.xlu0 %2838
        %2841 = vset.pattern.permute.xlu0 5
        %2842 = vperm.xlu0 %2841, %v2269
        %v2843 = vpop.permute.xlu0 %2842
        %2845 = vset.pattern.permute.xlu0 5
        %2846 = vperm.xlu0 %2845, %v2270
        %v2847 = vpop.permute.xlu0 %2846
        %2849 = vset.pattern.permute.xlu0 5
        %2850 = vperm.xlu0 %2849, %v2271
        %v2851 = vpop.permute.xlu0 %2850
        %2853 = vset.pattern.permute.xlu0 5
        %2854 = vperm.xlu0 %2853, %v2272
        %v2855 = vpop.permute.xlu0 %2854
        %v2857 = vlaneseq
        %v2858 = vshrl.u32 %v2857, 7
        %v2859 = vsub.s32 1, %v2858
        %v2860 = vrot.slane %v164, %v2859
        %v2861 = vmul.f32 %v2795, %v2860
        %v2862 = vmul.f32 %v2799, %v2860
        %v2863 = vmul.f32 %v2803, %v2860
        %v2864 = vmul.f32 %v2807, %v2860
        %v2865 = vmul.f32 %v2811, %v2860
        %v2866 = vmul.f32 %v2815, %v2860
        %v2867 = vmul.f32 %v2819, %v2860
        %v2868 = vmul.f32 %v2823, %v2860
        %v2869 = vmul.f32 %v2827, %v2860
        %v2870 = vmul.f32 %v2831, %v2860
        %v2871 = vmul.f32 %v2835, %v2860
        %v2872 = vmul.f32 %v2839, %v2860
        %v2873 = vmul.f32 %v2843, %v2860
        %v2874 = vmul.f32 %v2847, %v2860
        %v2875 = vmul.f32 %v2851, %v2860
        %v2876 = vmul.f32 %v2855, %v2860
        %v2877 = vadd.f32 %v2777, %v2861
        %v2878 = vadd.f32 %v2778, %v2862
        %v2879 = vadd.f32 %v2779, %v2863
        %v2880 = vadd.f32 %v2780, %v2864
        %v2881 = vadd.f32 %v2781, %v2865
        %v2882 = vadd.f32 %v2782, %v2866
        %v2883 = vadd.f32 %v2783, %v2867
        %v2884 = vadd.f32 %v2784, %v2868
        %v2885 = vadd.f32 %v2785, %v2869
        %v2886 = vadd.f32 %v2786, %v2870
        %v2887 = vadd.f32 %v2787, %v2871
        %v2888 = vadd.f32 %v2788, %v2872
        %v2889 = vadd.f32 %v2789, %v2873
        %v2890 = vadd.f32 %v2790, %v2874
        %v2891 = vadd.f32 %v2791, %v2875
        %v2892 = vadd.f32 %v2792, %v2876
        %2893 = vset.pattern.permute.xlu0 6
        %2894 = vperm.xlu0 %2893, %v2257
        %v2895 = vpop.permute.xlu0 %2894
        %2897 = vset.pattern.permute.xlu0 6
        %2898 = vperm.xlu0 %2897, %v2258
        %v2899 = vpop.permute.xlu0 %2898
        %2901 = vset.pattern.permute.xlu0 6
        %2902 = vperm.xlu0 %2901, %v2259
        %v2903 = vpop.permute.xlu0 %2902
        %2905 = vset.pattern.permute.xlu0 6
        %2906 = vperm.xlu0 %2905, %v2260
        %v2907 = vpop.permute.xlu0 %2906
        %2909 = vset.pattern.permute.xlu0 6
        %2910 = vperm.xlu0 %2909, %v2261
        %v2911 = vpop.permute.xlu0 %2910
        %2913 = vset.pattern.permute.xlu0 6
        %2914 = vperm.xlu0 %2913, %v2262
        %v2915 = vpop.permute.xlu0 %2914
        %2917 = vset.pattern.permute.xlu0 6
        %2918 = vperm.xlu0 %2917, %v2263
        %v2919 = vpop.permute.xlu0 %2918
        %2921 = vset.pattern.permute.xlu0 6
        %2922 = vperm.xlu0 %2921, %v2264
        %v2923 = vpop.permute.xlu0 %2922
        %2925 = vset.pattern.permute.xlu0 6
        %2926 = vperm.xlu0 %2925, %v2265
        %v2927 = vpop.permute.xlu0 %2926
        %2929 = vset.pattern.permute.xlu0 6
        %2930 = vperm.xlu0 %2929, %v2266
        %v2931 = vpop.permute.xlu0 %2930
        %2933 = vset.pattern.permute.xlu0 6
        %2934 = vperm.xlu0 %2933, %v2267
        %v2935 = vpop.permute.xlu0 %2934
        %2937 = vset.pattern.permute.xlu0 6
        %2938 = vperm.xlu0 %2937, %v2268
        %v2939 = vpop.permute.xlu0 %2938
        %2941 = vset.pattern.permute.xlu0 6
        %2942 = vperm.xlu0 %2941, %v2269
        %v2943 = vpop.permute.xlu0 %2942
        %2945 = vset.pattern.permute.xlu0 6
        %2946 = vperm.xlu0 %2945, %v2270
        %v2947 = vpop.permute.xlu0 %2946
        %2949 = vset.pattern.permute.xlu0 6
        %2950 = vperm.xlu0 %2949, %v2271
        %v2951 = vpop.permute.xlu0 %2950
        %2953 = vset.pattern.permute.xlu0 6
        %2954 = vperm.xlu0 %2953, %v2272
        %v2955 = vpop.permute.xlu0 %2954
        %v2957 = vlaneseq
        %v2958 = vshrl.u32 %v2957, 7
        %v2959 = vsub.s32 2, %v2958
        %v2960 = vrot.slane %v164, %v2959
        %v2961 = vmul.f32 %v2895, %v2960
        %v2962 = vmul.f32 %v2899, %v2960
        %v2963 = vmul.f32 %v2903, %v2960
        %v2964 = vmul.f32 %v2907, %v2960
        %v2965 = vmul.f32 %v2911, %v2960
        %v2966 = vmul.f32 %v2915, %v2960
        %v2967 = vmul.f32 %v2919, %v2960
        %v2968 = vmul.f32 %v2923, %v2960
        %v2969 = vmul.f32 %v2927, %v2960
        %v2970 = vmul.f32 %v2931, %v2960
        %v2971 = vmul.f32 %v2935, %v2960
        %v2972 = vmul.f32 %v2939, %v2960
        %v2973 = vmul.f32 %v2943, %v2960
        %v2974 = vmul.f32 %v2947, %v2960
        %v2975 = vmul.f32 %v2951, %v2960
        %v2976 = vmul.f32 %v2955, %v2960
        %v2977 = vadd.f32 %v2877, %v2961
        %v2978 = vadd.f32 %v2878, %v2962
        %v2979 = vadd.f32 %v2879, %v2963
        %v2980 = vadd.f32 %v2880, %v2964
        %v2981 = vadd.f32 %v2881, %v2965
        %v2982 = vadd.f32 %v2882, %v2966
        %v2983 = vadd.f32 %v2883, %v2967
        %v2984 = vadd.f32 %v2884, %v2968
        %v2985 = vadd.f32 %v2885, %v2969
        %v2986 = vadd.f32 %v2886, %v2970
        %v2987 = vadd.f32 %v2887, %v2971
        %v2988 = vadd.f32 %v2888, %v2972
        %v2989 = vadd.f32 %v2889, %v2973
        %v2990 = vadd.f32 %v2890, %v2974
        %v2991 = vadd.f32 %v2891, %v2975
        %v2992 = vadd.f32 %v2892, %v2976
        %2993 = vset.pattern.permute.xlu0 7
        %2994 = vperm.xlu0 %2993, %v2257
        %v2995 = vpop.permute.xlu0 %2994
        %2997 = vset.pattern.permute.xlu0 7
        %2998 = vperm.xlu0 %2997, %v2258
        %v2999 = vpop.permute.xlu0 %2998
        %3001 = vset.pattern.permute.xlu0 7
        %3002 = vperm.xlu0 %3001, %v2259
        %v3003 = vpop.permute.xlu0 %3002
        %3005 = vset.pattern.permute.xlu0 7
        %3006 = vperm.xlu0 %3005, %v2260
        %v3007 = vpop.permute.xlu0 %3006
        %3009 = vset.pattern.permute.xlu0 7
        %3010 = vperm.xlu0 %3009, %v2261
        %v3011 = vpop.permute.xlu0 %3010
        %3013 = vset.pattern.permute.xlu0 7
        %3014 = vperm.xlu0 %3013, %v2262
        %v3015 = vpop.permute.xlu0 %3014
        %3017 = vset.pattern.permute.xlu0 7
        %3018 = vperm.xlu0 %3017, %v2263
        %v3019 = vpop.permute.xlu0 %3018
        %3021 = vset.pattern.permute.xlu0 7
        %3022 = vperm.xlu0 %3021, %v2264
        %v3023 = vpop.permute.xlu0 %3022
        %3025 = vset.pattern.permute.xlu0 7
        %3026 = vperm.xlu0 %3025, %v2265
        %v3027 = vpop.permute.xlu0 %3026
        %3029 = vset.pattern.permute.xlu0 7
        %3030 = vperm.xlu0 %3029, %v2266
        %v3031 = vpop.permute.xlu0 %3030
        %3033 = vset.pattern.permute.xlu0 7
        %3034 = vperm.xlu0 %3033, %v2267
        %v3035 = vpop.permute.xlu0 %3034
        %3037 = vset.pattern.permute.xlu0 7
        %3038 = vperm.xlu0 %3037, %v2268
        %v3039 = vpop.permute.xlu0 %3038
        %3041 = vset.pattern.permute.xlu0 7
        %3042 = vperm.xlu0 %3041, %v2269
        %v3043 = vpop.permute.xlu0 %3042
        %3045 = vset.pattern.permute.xlu0 7
        %3046 = vperm.xlu0 %3045, %v2270
        %v3047 = vpop.permute.xlu0 %3046
        %3049 = vset.pattern.permute.xlu0 7
        %3050 = vperm.xlu0 %3049, %v2271
        %v3051 = vpop.permute.xlu0 %3050
        %3053 = vset.pattern.permute.xlu0 7
        %3054 = vperm.xlu0 %3053, %v2272
        %v3055 = vpop.permute.xlu0 %3054
        %v3057 = vlaneseq
        %v3058 = vshrl.u32 %v3057, 7
        %v3059 = vsub.s32 3, %v3058
        %v3060 = vrot.slane %v164, %v3059
        %v3061 = vmul.f32 %v2995, %v3060
        %v3062 = vmul.f32 %v2999, %v3060
        %v3063 = vmul.f32 %v3003, %v3060
        %v3064 = vmul.f32 %v3007, %v3060
        %v3065 = vmul.f32 %v3011, %v3060
        %v3066 = vmul.f32 %v3015, %v3060
        %v3067 = vmul.f32 %v3019, %v3060
        %v3068 = vmul.f32 %v3023, %v3060
        %v3069 = vmul.f32 %v3027, %v3060
        %v3070 = vmul.f32 %v3031, %v3060
        %v3071 = vmul.f32 %v3035, %v3060
        %v3072 = vmul.f32 %v3039, %v3060
        %v3073 = vmul.f32 %v3043, %v3060
        %v3074 = vmul.f32 %v3047, %v3060
        %v3075 = vmul.f32 %v3051, %v3060
        %v3076 = vmul.f32 %v3055, %v3060
        %v3077 = vadd.f32 %v2977, %v3061
        %v3078 = vadd.f32 %v2978, %v3062
        %v3079 = vadd.f32 %v2979, %v3063
        %v3080 = vadd.f32 %v2980, %v3064
        %v3081 = vadd.f32 %v2981, %v3065
        %v3082 = vadd.f32 %v2982, %v3066
        %v3083 = vadd.f32 %v2983, %v3067
        %v3084 = vadd.f32 %v2984, %v3068
        %v3085 = vadd.f32 %v2985, %v3069
        %v3086 = vadd.f32 %v2986, %v3070
        %v3087 = vadd.f32 %v2987, %v3071
        %v3088 = vadd.f32 %v2988, %v3072
        %v3089 = vadd.f32 %v2989, %v3073
        %v3090 = vadd.f32 %v2990, %v3074
        %v3091 = vadd.f32 %v2991, %v3075
        %v3092 = vadd.f32 %v2992, %v3076
        %3093 = vst [vmem:[%s137] sm:$0xff] %v3077
        %3094 = vst [vmem:[%s137 + $0x8] sm:$0xff] %v3078
        %3095 = vst [vmem:[%s137 + $0x10] sm:$0xff] %v3079
        %3096 = vst [vmem:[%s137 + $0x18] sm:$0xff] %v3080
        %3097 = vst [vmem:[%s137 + $0x20] sm:$0xff] %v3081
        %3098 = vst [vmem:[%s137 + $0x28] sm:$0xff] %v3082
        %3099 = vst [vmem:[%s137 + $0x30] sm:$0xff] %v3083
        %3100 = vst [vmem:[%s137 + $0x38] sm:$0xff] %v3084
        %3101 = vst [vmem:[%s137 + $0x40] sm:$0xff] %v3085
        %3102 = vst [vmem:[%s137 + $0x48] sm:$0xff] %v3086
        %3103 = vst [vmem:[%s137 + $0x50] sm:$0xff] %v3087
        %3104 = vst [vmem:[%s137 + $0x58] sm:$0xff] %v3088
        %3105 = vst [vmem:[%s137 + $0x60] sm:$0xff] %v3089
        %3106 = vst [vmem:[%s137 + $0x68] sm:$0xff] %v3090
        %3107 = vst [vmem:[%s137 + $0x70] sm:$0xff] %v3091
        %3108 = vst [vmem:[%s137 + $0x78] sm:$0xff] %v3092
        %s3109 = sand.u32 %s71, 1
        %s3110 = scalar_lea.sflag [#allocation3], %s3109
        %s3111 = sand.u32 %s71, 1
        %s3112 = smul.addr %s3111, 128
        %s3113 = scalar_lea.vmem [#allocation2], %s3112
        // Predicated region
        $region29: #{tpu_custom_call.1} parent=27 // pred_check
          %p3114 = pneg %p81
        $region30: #{tpu_custom_call.1} parent=27 // pred_check_branch
          %3116 = sbr.rel (%p3114) target = $region32
        $region31: #{tpu_custom_call.1} parent=27 // pred_region
          %s3117 = smul.u32 16, %s16
          %s3119 = ssub.s32 2048, 2048
          %3120 = vsyncadd %s3110, %s3119
          %s3121 = smul.addr %s3117, 128
          %s3122 = scalar_lea.hbm %s2, %s3121
          %s3123 = sshll.u32 %s3113, 4
          %s3124 = int_to_ptr.vmem [resolvable:$true] %s3123
          %3129 = dma.vmem_to_hbm [thread:$0]  %s3124, 2048, %s3122, %s3110, 128, 128, 8
        $region32: #{tpu_custom_call.1} parent=27 // pred_fallthru
          _
      $region28: #{tpu_custom_call.1} parent=5 // pred_fallthru
        _
      %p3130 = scmp.le.s32.totalorder 2, %s11
      // Predicated region
      $region33: #{tpu_custom_call.1} parent=5 // pred_check
        %p3131 = pneg %p3130
      $region34: #{tpu_custom_call.1} parent=5 // pred_check_branch
        %3133 = sbr.rel (%p3131) target = $region36
      $region35: #{tpu_custom_call.1} parent=5 // pred_region
        %s3134 = ssub.s32 %s11, 2
        // Predicated region
        $region37: #{tpu_custom_call.1} parent=35 // pred_check
          %p3135 = pneg %p87
        $region38: #{tpu_custom_call.1} parent=35 // pred_check_branch
          %3137 = sbr.rel (%p3135) target = $region40
        $region39: #{tpu_custom_call.1} parent=35 // pred_region
          %s3138 = sand.u32 %s72, 1
          %s3139 = scalar_lea.sflag [#allocation3], %s3138
          %s3140 = sand.u32 %s72, 1
          %s3141 = smul.addr %s3140, 128
          %s3142 = scalar_lea.vmem [#allocation2], %s3141
          %3143 = dma.done %s3139, 2048
        $region40: #{tpu_custom_call.1} parent=35 // pred_fallthru
          _
      $region36: #{tpu_custom_call.1} parent=5 // pred_fallthru
        _
    $region6: #{tpu_custom_call.1} parent=1 // loop_footer
      %s15 = sadd.s32 1, %s11
    $region7: #{tpu_custom_call.1} parent=1 // loop_footer_branch
      %10 = sbr.rel target = $region3
    $region8: #{tpu_custom_call.1} parent=1 // loop_exit
      _
    %3144 = vsyncpa [#allocation3], 1
    %s3145 = scalar_lea.sflag [#allocation3], 1
    %3146 = vsyncpa %s3145, 1

</llo_original>
